<compile_context>
chip_gen: v5e
topology: v5e:2x2
jax: 0.10.0
libtpu: 0.0.40
codegen_flags: <defaults>
</compile_context>

<pallas_src>
from functools import partial

import jax
import jax.numpy as jnp
from jax import lax
from jax.experimental import pallas as pl
from jax.experimental.pallas import tpu as pltpu


def _round_up(x, m):
    return (x + m - 1) // m * m


def _pad_seq(x, target_len):
    pad = target_len - x.shape[1]
    if pad == 0:
        return x
    return jnp.pad(x, ((0, 0), (0, pad), (0, 0)))


def attention_kernel(q_ref, k_ref, v_ref,
                     wq_ref, bq_ref, wk_ref, bk_ref, wv_ref, bv_ref,
                     wo_ref, bo_ref, kbias_ref,
                     *rest,
                     n_heads, d_keys, d_values, s_valid, s_pad,
                     output_attention):
    if output_attention:
        out_ref, attn_ref, kf_ref, vf_ref = rest
    else:
        out_ref, kf_ref, vf_ref = rest
        attn_ref = None

    l = pl.program_id(1)

    # Full-width K/V projections once per batch (resident across L-tiles).
    @pl.when(l == 0)
    def _():
        k = k_ref[0]                                           # [S_pad, D] bf16
        v = v_ref[0]
        kf_ref[...] = (jnp.dot(k, wk_ref[...], preferred_element_type=jnp.float32)
                       + bk_ref[...]).astype(kf_ref.dtype)     # [S_pad, H*dk]
        vf_ref[...] = (jnp.dot(v, wv_ref[...], preferred_element_type=jnp.float32)
                       + bv_ref[...]).astype(vf_ref.dtype)     # [S_pad, H*dv]

    # Full-width Q projection for this query tile (1/sqrt(dk) already folded
    # into wq/bq).
    q = q_ref[0]                                               # [tL, D] bf16
    qf = (jnp.dot(q, wq_ref[...], preferred_element_type=jnp.float32)
          + bq_ref[...]).astype(jnp.bfloat16)                  # [tL, H*dk]

    kbias = kbias_ref[...]                                     # [1, S_pad] f32

    # Static per-head loop: all slices are static (no dynamic lane slicing).
    ctx_heads = []
    for h in range(n_heads):
        qh = qf[:, h * d_keys:(h + 1) * d_keys]                # [tL, dk]
        kh = kf_ref[:, h * d_keys:(h + 1) * d_keys]            # [S_pad, dk]
        vh = vf_ref[:, h * d_values:(h + 1) * d_values]        # [S_pad, dv]

        # scores = Qh @ Kh^T without an explicit transpose (contract dk axes).
        scores = lax.dot_general(qh, kh, (((1,), (1,)), ((), ())),
                                 preferred_element_type=jnp.float32)
        if s_pad > s_valid:                                    # static
            scores = scores + kbias                            # mask padded keys

        m = jnp.max(scores, axis=-1, keepdims=True)
        e = jnp.exp(scores - m)
        denom = jnp.sum(e, axis=-1, keepdims=True)
        a = e * pl.reciprocal(denom, approx=True)              # softmax over keys

        if output_attention:
            attn_ref[0, h] = a.astype(attn_ref.dtype)          # lane-dense store

        ctx_heads.append(
            jnp.dot(a.astype(jnp.bfloat16), vh,
                    preferred_element_type=jnp.float32).astype(jnp.bfloat16))

    # Single deep output projection over all heads: [tL, H*dv] @ [H*dv, D].
    ctx = jnp.concatenate(ctx_heads, axis=-1)
    out = jnp.dot(ctx, wo_ref[...], preferred_element_type=jnp.float32) + bo_ref[...]
    out_ref[0] = out.astype(out_ref.dtype)


def attention_layer(queries, keys, values, params, n_heads,
                    output_attention=True, block_l=None,
                    attn_dtype=jnp.bfloat16, compute_dtype=jnp.bfloat16):
    """params = (wq, bq, wk, bk, wv, bv, wo, bo); weights [in, out], biases [1, out].

    Returns (out[B, L, D] float32, attn[B, H, L, S] attn_dtype or None).
    attn is stored in bf16 by default (halves the dominant HBM writeback);
    pass attn_dtype=jnp.float32 for exact module semantics.
    """
    B, L, D = queries.shape
    _, S, _ = keys.shape
    wq, bq, wk, bk, wv, bv, wo, bo = params
    hk = wq.shape[1]                      # n_heads * d_keys
    hv = wv.shape[1]                      # n_heads * d_values
    d_keys = hk // n_heads
    d_values = hv // n_heads
    scale = 1.0 / (d_keys ** 0.5)

    S_pad = _round_up(S, 128)             # lane multiple -> unmasked attn stores

    # Query-tile size: bound the (1, H, tL, S_pad) attn block (+ f32 scores
    # temporaries) so VMEM stays bounded at long sequences (v7x: 64 MiB VMEM).
    if block_l is None:
        attn_row_bytes = n_heads * S_pad * jnp.dtype(attn_dtype).itemsize
        block_l = max(16, min(512, (8 * 1024 * 1024) // max(attn_row_bytes, 1)))
        block_l = max(16, (block_l // 16) * 16)
    block_l = min(block_l, _round_up(L, 16))
    block_l = max(16, (block_l // 16) * 16)   # bf16 sublane packing (2 rows/sublane)
    L_pad = _round_up(L, block_l)
    n_l = L_pad // block_l

    cdt = compute_dtype
    qp = _pad_seq(queries, L_pad).astype(cdt)
    kp = _pad_seq(keys, S_pad).astype(cdt)
    vp = _pad_seq(values, S_pad).astype(cdt)

    # Full-width weights (resident in VMEM via constant index_maps); fold the
    # softmax scale into the Q projection.
    wq_c = (wq * scale).astype(cdt)
    bq_c = (bq * scale).reshape(1, hk).astype(jnp.float32)
    wk_c = wk.astype(cdt)
    bk_c = bk.reshape(1, hk).astype(jnp.float32)
    wv_c = wv.astype(cdt)
    bv_c = bv.reshape(1, hv).astype(jnp.float32)
    wo_c = wo.astype(cdt)
    bo_c = bo.reshape(1, D).astype(jnp.float32)

    # Additive key-pad mask row: 0 for valid columns, -1e30 for padding.
    kbias = jnp.where(jnp.arange(S_pad)[None, :] < S, 0.0, -1e30).astype(jnp.float32)

    kernel = partial(attention_kernel, n_heads=n_heads, d_keys=d_keys,
                     d_values=d_values, s_valid=S, s_pad=S_pad,
                     output_attention=output_attention)

    in_specs = [
        pl.BlockSpec((1, block_l, D), lambda b, l: (b, l, 0)),   # q tile
        pl.BlockSpec((1, S_pad, D), lambda b, l: (b, 0, 0)),     # k (per batch)
        pl.BlockSpec((1, S_pad, D), lambda b, l: (b, 0, 0)),     # v (per batch)
        pl.BlockSpec((D, hk), lambda b, l: (0, 0)),              # Wq (resident)
        pl.BlockSpec((1, hk), lambda b, l: (0, 0)),
        pl.BlockSpec((D, hk), lambda b, l: (0, 0)),              # Wk
        pl.BlockSpec((1, hk), lambda b, l: (0, 0)),
        pl.BlockSpec((D, hv), lambda b, l: (0, 0)),              # Wv
        pl.BlockSpec((1, hv), lambda b, l: (0, 0)),
        pl.BlockSpec((hv, D), lambda b, l: (0, 0)),              # Wo
        pl.BlockSpec((1, D), lambda b, l: (0, 0)),               # bo
        pl.BlockSpec((1, S_pad), lambda b, l: (0, 0)),           # key-pad bias
    ]

    out_shapes = [jax.ShapeDtypeStruct((B, L_pad, D), jnp.float32)]
    out_specs = [pl.BlockSpec((1, block_l, D), lambda b, l: (b, l, 0))]
    if output_attention:
        out_shapes.append(
            jax.ShapeDtypeStruct((B, n_heads, L_pad, S_pad), attn_dtype))
        out_specs.append(
            pl.BlockSpec((1, n_heads, block_l, S_pad), lambda b, l: (b, 0, l, 0)))

    scratch_shapes = [pltpu.VMEM((S_pad, hk), cdt),   # K projection (per batch)
                      pltpu.VMEM((S_pad, hv), cdt)]   # V projection (per batch)

    # Cost estimate (helps XLA schedule around the custom call).
    attn_item = jnp.dtype(attn_dtype).itemsize
    item = jnp.dtype(cdt).itemsize
    flops = int(2 * B * (L_pad * D * hk + S_pad * D * hk + S_pad * D * hv)
                + 2 * B * n_heads * L_pad * S_pad * (d_keys + d_values)
                + 2 * B * L_pad * hv * D)
    transcendentals = int(B * n_heads * L_pad * S_pad)
    bytes_accessed = int(
        (qp.size + kp.size + vp.size) * item
        + (D * hk * 2 + D * hv + hv * D) * item
        + B * L_pad * D * 4
        + (B * n_heads * L_pad * S_pad * attn_item if output_attention else 0))

    # Raise the scoped VMEM limit above the 16/32 MiB defaults (kept <= 64 MiB,
    # v7x physical VMEM).
    est = (2 * ((block_l * D + 2 * S_pad * D) * item + block_l * D * 4
                + (n_heads * block_l * S_pad * attn_item if output_attention else 0))
           + 2 * (2 * D * hk + D * hv + hv * D) * item
           + S_pad * (hk + hv) * item
           + (4 << 20))
    vmem_limit = int(min(max(est, 32 << 20), 64 << 20))

    results = pl.pallas_call(
        kernel,
        out_shape=tuple(out_shapes),
        grid=(B, n_l),
        in_specs=in_specs,
        out_specs=tuple(out_specs),
        scratch_shapes=scratch_shapes,
        compiler_params=pltpu.CompilerParams(
            # B stays "parallel" (v7x megacore); L is "arbitrary" because the
            # K/V-projection scratch is initialized on the first L-tile.
            dimension_semantics=("parallel", "arbitrary"),
            vmem_limit_bytes=vmem_limit),
        cost_estimate=pl.CostEstimate(flops=flops,
                                      transcendentals=transcendentals,
                                      bytes_accessed=bytes_accessed),
    )(qp, kp, vp, wq_c, bq_c, wk_c, bk_c, wv_c, bv_c, wo_c, bo_c, kbias)

    if output_attention:
        out, attn = results
        return out[:, :L], attn[:, :, :L, :S]
    (out,) = results
    return out[:, :L], None


def init_linear(key, in_features, out_features):
    # Mimics nn.Linear default init: U(-1/sqrt(in), 1/sqrt(in)).
    kw, kb = jax.random.split(key)
    bound = 1.0 / (in_features ** 0.5)
    w = jax.random.uniform(kw, (in_features, out_features), jnp.float32, -bound, bound)
    b = jax.random.uniform(kb, (1, out_features), jnp.float32, -bound, bound)
    return w, b


def reference(queries, keys, values, params, n_heads):
    wq, bq, wk, bk, wv, bv, wo, bo = params
    B, L, D = queries.shape
    _, S, _ = keys.shape
    dk = wq.shape[1] // n_heads
    dv = wv.shape[1] // n_heads
    Q = (queries @ wq + bq).reshape(B, L, n_heads, dk)
    K = (keys @ wk + bk).reshape(B, S, n_heads, dk)
    V = (values @ wv + bv).reshape(B, S, n_heads, dv)
    scores = jnp.einsum("blhd,bshd->bhls", Q, K) / (dk ** 0.5)
    A = jax.nn.softmax(scores, axis=-1)
    O = jnp.einsum("bhls,bshd->blhd", A, V).reshape(B, L, n_heads * dv)
    return O @ wo + bo, A


if __name__ == "__main__":
    B, L, S = 2, 8, 8
    d_model, n_heads = 32, 4
    d_keys = d_values = d_model // n_heads

    root = jax.random.PRNGKey(0)
    kq, kk, kv, ko, kx1, kx2, kx3 = jax.random.split(root, 7)

    wq, bq = init_linear(kq, d_model, d_keys * n_heads)
    wk, bk = init_linear(kk, d_model, d_keys * n_heads)
    wv, bv = init_linear(kv, d_model, d_values * n_heads)
    wo, bo = init_linear(ko, d_values * n_heads, d_model)
    params = (wq, bq, wk, bk, wv, bv, wo, bo)

    queries = jax.random.normal(kx1, (B, L, d_model), jnp.float32)
    keys = jax.random.normal(kx2, (B, S, d_model), jnp.float32)
    values = jax.random.normal(kx3, (B, S, d_model), jnp.float32)

    # attn_mask is ignored (FullAttention, mask_flag=False assumed).
    out, attn = attention_layer(queries, keys, values, params, n_heads,
                                output_attention=True)
    out = jax.block_until_ready(out)
    attn = jax.block_until_ready(attn)

    out_ref, attn_ref = reference(queries, keys, values, params, n_heads)
    assert out.shape == (B, L, d_model) and attn.shape == (B, n_heads, L, S)
    # bf16 compute / bf16 attn storage -> slightly looser tolerance than pure f32.
    assert jnp.allclose(out, out_ref, atol=2e-2, rtol=2e-2)
    assert jnp.allclose(attn.astype(jnp.float32), attn_ref, atol=2e-2, rtol=2e-2)

    # No-attention-writeback variant (Informer output_attention=False path).
    out2, attn2 = attention_layer(queries, keys, values, params, n_heads,
                                  output_attention=False)
    out2 = jax.block_until_ready(out2)
    assert attn2 is None
    assert jnp.allclose(out2, out_ref, atol=2e-2, rtol=2e-2)

    print("KERNEL_OK")
</pallas_src>

<mosaic_0001>
module attributes {stable_mosaic.version = 11 : i64} {
  func.func @attention_kernel(%arg0: i32, %arg1: i32, %arg2: memref<1x16x32xbf16, #tpu.memory_space<vmem>>, %arg3: memref<1x128x32xbf16, #tpu.memory_space<vmem>>, %arg4: memref<1x128x32xbf16, #tpu.memory_space<vmem>>, %arg5: memref<32x32xbf16, #tpu.memory_space<vmem>>, %arg6: memref<1x32xf32, #tpu.memory_space<vmem>>, %arg7: memref<32x32xbf16, #tpu.memory_space<vmem>>, %arg8: memref<1x32xf32, #tpu.memory_space<vmem>>, %arg9: memref<32x32xbf16, #tpu.memory_space<vmem>>, %arg10: memref<1x32xf32, #tpu.memory_space<vmem>>, %arg11: memref<32x32xbf16, #tpu.memory_space<vmem>>, %arg12: memref<1x32xf32, #tpu.memory_space<vmem>>, %arg13: memref<1x128xf32, #tpu.memory_space<vmem>>, %arg14: memref<1x16x32xf32, #tpu.memory_space<vmem>>, %arg15: memref<1x4x16x128xbf16, #tpu.memory_space<vmem>>, %arg16: memref<128x32xbf16, #tpu.memory_space<vmem>>, %arg17: memref<128x32xbf16, #tpu.memory_space<vmem>>) attributes {dimension_semantics = [#tpu.dimension_semantics<parallel>, #tpu.dimension_semantics<arbitrary>], iteration_bounds = array<i64: 2, 1>, scalar_prefetch = 0 : i64, scratch_operands = 2 : i64, tpu.core_type = #tpu.core_type<tc>, window_params = [{transform_indices = @transform_0, window_bounds = array<i64: 1, 16, 32>}, {transform_indices = @transform_1, window_bounds = array<i64: 1, 128, 32>}, {transform_indices = @transform_2, window_bounds = array<i64: 1, 128, 32>}, {pipeline_mode = #tpu.pipeline_mode<synchronous>, transform_indices = @transform_3, window_bounds = array<i64: 32, 32>}, {pipeline_mode = #tpu.pipeline_mode<synchronous>, transform_indices = @transform_4, window_bounds = array<i64: 1, 32>}, {pipeline_mode = #tpu.pipeline_mode<synchronous>, transform_indices = @transform_5, window_bounds = array<i64: 32, 32>}, {pipeline_mode = #tpu.pipeline_mode<synchronous>, transform_indices = @transform_6, window_bounds = array<i64: 1, 32>}, {pipeline_mode = #tpu.pipeline_mode<synchronous>, transform_indices = @transform_7, window_bounds = array<i64: 32, 32>}, {pipeline_mode = #tpu.pipeline_mode<synchronous>, transform_indices = @transform_8, window_bounds = array<i64: 1, 32>}, {pipeline_mode = #tpu.pipeline_mode<synchronous>, transform_indices = @transform_9, window_bounds = array<i64: 32, 32>}, {pipeline_mode = #tpu.pipeline_mode<synchronous>, transform_indices = @transform_10, window_bounds = array<i64: 1, 32>}, {pipeline_mode = #tpu.pipeline_mode<synchronous>, transform_indices = @transform_11, window_bounds = array<i64: 1, 128>}, {transform_indices = @transform_12, window_bounds = array<i64: 1, 16, 32>}, {transform_indices = @transform_13, window_bounds = array<i64: 1, 4, 16, 128>}]} {
    %c0_i32 = arith.constant 0 : i32
    %0 = arith.cmpi eq, %arg1, %c0_i32 : i32
    %1 = arith.extui %0 : i1 to i32
    %c0_i32_0 = arith.constant 0 : i32
    %2 = arith.cmpi ne, %1, %c0_i32_0 : i32
    scf.if %2 {
      %c0_59 = arith.constant 0 : index
      %c0_60 = arith.constant 0 : index
      %c0_61 = arith.constant 0 : index
      %113 = vector.load %arg3[%c0_59, %c0_60, %c0_61] : memref<1x128x32xbf16, #tpu.memory_space<vmem>>, vector<1x128x32xbf16>
      %114 = vector.shape_cast %113 : vector<1x128x32xbf16> to vector<128x32xbf16>
      %c0_62 = arith.constant 0 : index
      %c0_63 = arith.constant 0 : index
      %c0_64 = arith.constant 0 : index
      %115 = vector.load %arg4[%c0_62, %c0_63, %c0_64] : memref<1x128x32xbf16, #tpu.memory_space<vmem>>, vector<1x128x32xbf16>
      %116 = vector.shape_cast %115 : vector<1x128x32xbf16> to vector<128x32xbf16>
      %c0_65 = arith.constant 0 : index
      %c0_66 = arith.constant 0 : index
      %117 = vector.load %arg7[%c0_65, %c0_66] : memref<32x32xbf16, #tpu.memory_space<vmem>>, vector<32x32xbf16>
      %cst_67 = arith.constant dense<0.000000e+00> : vector<128x32xf32>
      %118 = tpu.matmul %114, %117, %cst_67 {dimension_numbers = #tpu.dot_dimension_numbers<[1], [0], [0], [1], [0, 0, 1, 1], [], []>} : vector<128x32xbf16>, vector<32x32xbf16>, vector<128x32xf32> -> vector<128x32xf32>
      %c0_68 = arith.constant 0 : index
      %c0_69 = arith.constant 0 : index
      %119 = vector.load %arg8[%c0_68, %c0_69] : memref<1x32xf32, #tpu.memory_space<vmem>>, vector<1x32xf32>
      %120 = vector.broadcast %119 : vector<1x32xf32> to vector<128x32xf32>
      %121 = arith.addf %118, %120 : vector<128x32xf32>
      %122 = arith.truncf %121 : vector<128x32xf32> to vector<128x32xbf16>
      %c0_70 = arith.constant 0 : index
      %c0_71 = arith.constant 0 : index
      %123 = vector.load %arg16[%c0_70, %c0_71] : memref<128x32xbf16, #tpu.memory_space<vmem>>, vector<128x32xbf16>
      tpu.vector_store %arg16[%c0_70, %c0_71], %122 {strides = array<i32>} : memref<128x32xbf16, #tpu.memory_space<vmem>>, vector<128x32xbf16>,
      %c0_72 = arith.constant 0 : index
      %c0_73 = arith.constant 0 : index
      %124 = vector.load %arg9[%c0_72, %c0_73] : memref<32x32xbf16, #tpu.memory_space<vmem>>, vector<32x32xbf16>
      %cst_74 = arith.constant dense<0.000000e+00> : vector<128x32xf32>
      %125 = tpu.matmul %116, %124, %cst_74 {dimension_numbers = #tpu.dot_dimension_numbers<[1], [0], [0], [1], [0, 0, 1, 1], [], []>} : vector<128x32xbf16>, vector<32x32xbf16>, vector<128x32xf32> -> vector<128x32xf32>
      %c0_75 = arith.constant 0 : index
      %c0_76 = arith.constant 0 : index
      %126 = vector.load %arg10[%c0_75, %c0_76] : memref<1x32xf32, #tpu.memory_space<vmem>>, vector<1x32xf32>
      %127 = vector.broadcast %126 : vector<1x32xf32> to vector<128x32xf32>
      %128 = arith.addf %125, %127 : vector<128x32xf32>
      %129 = arith.truncf %128 : vector<128x32xf32> to vector<128x32xbf16>
      %c0_77 = arith.constant 0 : index
      %c0_78 = arith.constant 0 : index
      %130 = vector.load %arg17[%c0_77, %c0_78] : memref<128x32xbf16, #tpu.memory_space<vmem>>, vector<128x32xbf16>
      tpu.vector_store %arg17[%c0_77, %c0_78], %129 {strides = array<i32>} : memref<128x32xbf16, #tpu.memory_space<vmem>>, vector<128x32xbf16>,
    } else {
    }
    %c0 = arith.constant 0 : index
    %c0_1 = arith.constant 0 : index
    %c0_2 = arith.constant 0 : index
    %3 = vector.load %arg2[%c0, %c0_1, %c0_2] : memref<1x16x32xbf16, #tpu.memory_space<vmem>>, vector<1x16x32xbf16>
    %4 = vector.shape_cast %3 : vector<1x16x32xbf16> to vector<16x32xbf16>
    %c0_3 = arith.constant 0 : index
    %c0_4 = arith.constant 0 : index
    %5 = vector.load %arg5[%c0_3, %c0_4] : memref<32x32xbf16, #tpu.memory_space<vmem>>, vector<32x32xbf16>
    %cst = arith.constant dense<0.000000e+00> : vector<16x32xf32>
    %6 = tpu.matmul %4, %5, %cst {dimension_numbers = #tpu.dot_dimension_numbers<[1], [0], [0], [1], [0, 0, 1, 1], [], []>} : vector<16x32xbf16>, vector<32x32xbf16>, vector<16x32xf32> -> vector<16x32xf32>
    %c0_5 = arith.constant 0 : index
    %c0_6 = arith.constant 0 : index
    %7 = vector.load %arg6[%c0_5, %c0_6] : memref<1x32xf32, #tpu.memory_space<vmem>>, vector<1x32xf32>
    %8 = vector.broadcast %7 : vector<1x32xf32> to vector<16x32xf32>
    %9 = arith.addf %6, %8 : vector<16x32xf32>
    %10 = arith.truncf %9 : vector<16x32xf32> to vector<16x32xbf16>
    %c0_7 = arith.constant 0 : index
    %c0_8 = arith.constant 0 : index
    %11 = vector.load %arg13[%c0_7, %c0_8] : memref<1x128xf32, #tpu.memory_space<vmem>>, vector<1x128xf32>
    %12 = vector.extract_strided_slice %10 {offsets = [0, 0], sizes = [16, 8], strides = [1, 1]} : vector<16x32xbf16> to vector<16x8xbf16>
    %c0_9 = arith.constant 0 : index
    %c0_10 = arith.constant 0 : index
    %13 = vector.load %arg16[%c0_9, %c0_10] : memref<128x32xbf16, #tpu.memory_space<vmem>>, vector<128x8xbf16>
    %c0_11 = arith.constant 0 : index
    %c0_12 = arith.constant 0 : index
    %14 = vector.load %arg17[%c0_11, %c0_12] : memref<128x32xbf16, #tpu.memory_space<vmem>>, vector<128x8xbf16>
    %cst_13 = arith.constant dense<0.000000e+00> : vector<16x128xf32>
    %15 = tpu.matmul %12, %13, %cst_13 {dimension_numbers = #tpu.dot_dimension_numbers<[1], [1], [0], [0], [0, 0, 1, 0], [], []>} : vector<16x8xbf16>, vector<128x8xbf16>, vector<16x128xf32> -> vector<16x128xf32>
    %16 = vector.broadcast %11 : vector<1x128xf32> to vector<16x128xf32>
    %17 = arith.addf %15, %16 : vector<16x128xf32>
    %cst_14 = arith.constant dense<0xFF800000> : vector<16xf32>
    %18 = vector.multi_reduction <maximumf>, %17, %cst_14 [1] : vector<16x128xf32> to vector<16xf32>
    %19 = vector.shape_cast %18 : vector<16xf32> to vector<16x1xf32>
    %20 = vector.broadcast %19 : vector<16x1xf32> to vector<16x128xf32>
    %21 = arith.subf %17, %20 : vector<16x128xf32>
    %22 = math.exp %21 : vector<16x128xf32>
    %cst_15 = arith.constant dense<0.000000e+00> : vector<16xf32>
    %23 = vector.multi_reduction <add>, %22, %cst_15 [1] : vector<16x128xf32> to vector<16xf32>
    %24 = vector.shape_cast %23 : vector<16xf32> to vector<16x1xf32>
    %25 = tpu.reciprocal %24 {approx = true} : vector<16x1xf32> -> vector<16x1xf32>
    %26 = vector.broadcast %25 : vector<16x1xf32> to vector<16x128xf32>
    %27 = arith.mulf %22, %26 : vector<16x128xf32>
    %28 = arith.truncf %27 : vector<16x128xf32> to vector<16x128xbf16>
    %c0_16 = arith.constant 0 : index
    %c0_17 = arith.constant 0 : index
    %c0_18 = arith.constant 0 : index
    %c0_19 = arith.constant 0 : index
    %29 = vector.load %arg15[%c0_16, %c0_17, %c0_18, %c0_19] : memref<1x4x16x128xbf16, #tpu.memory_space<vmem>>, vector<1x1x16x128xbf16>
    %30 = vector.shape_cast %29 : vector<1x1x16x128xbf16> to vector<16x128xbf16>
    %31 = vector.shape_cast %28 : vector<16x128xbf16> to vector<1x1x16x128xbf16>
    tpu.vector_store %arg15[%c0_16, %c0_17, %c0_18, %c0_19], %31 {strides = array<i32>} : memref<1x4x16x128xbf16, #tpu.memory_space<vmem>>, vector<1x1x16x128xbf16>,
    %32 = arith.truncf %27 : vector<16x128xf32> to vector<16x128xbf16>
    %cst_20 = arith.constant dense<0.000000e+00> : vector<16x8xf32>
    %33 = tpu.matmul %32, %14, %cst_20 {dimension_numbers = #tpu.dot_dimension_numbers<[1], [0], [0], [1], [0, 0, 1, 1], [], []>} : vector<16x128xbf16>, vector<128x8xbf16>, vector<16x8xf32> -> vector<16x8xf32>
    %34 = arith.truncf %33 : vector<16x8xf32> to vector<16x8xbf16>
    %35 = vector.extract_strided_slice %10 {offsets = [0, 8], sizes = [16, 8], strides = [1, 1]} : vector<16x32xbf16> to vector<16x8xbf16>
    %c0_21 = arith.constant 0 : index
    %c8 = arith.constant 8 : index
    %36 = vector.load %arg16[%c0_21, %c8] : memref<128x32xbf16, #tpu.memory_space<vmem>>, vector<128x8xbf16>
    %c0_22 = arith.constant 0 : index
    %c8_23 = arith.constant 8 : index
    %37 = vector.load %arg17[%c0_22, %c8_23] : memref<128x32xbf16, #tpu.memory_space<vmem>>, vector<128x8xbf16>
    %cst_24 = arith.constant dense<0.000000e+00> : vector<16x128xf32>
    %38 = tpu.matmul %35, %36, %cst_24 {dimension_numbers = #tpu.dot_dimension_numbers<[1], [1], [0], [0], [0, 0, 1, 0], [], []>} : vector<16x8xbf16>, vector<128x8xbf16>, vector<16x128xf32> -> vector<16x128xf32>
    %39 = vector.broadcast %11 : vector<1x128xf32> to vector<16x128xf32>
    %40 = arith.addf %38, %39 : vector<16x128xf32>
    %cst_25 = arith.constant dense<0xFF800000> : vector<16xf32>
    %41 = vector.multi_reduction <maximumf>, %40, %cst_25 [1] : vector<16x128xf32> to vector<16xf32>
    %42 = vector.shape_cast %41 : vector<16xf32> to vector<16x1xf32>
    %43 = vector.broadcast %42 : vector<16x1xf32> to vector<16x128xf32>
    %44 = arith.subf %40, %43 : vector<16x128xf32>
    %45 = math.exp %44 : vector<16x128xf32>
    %cst_26 = arith.constant dense<0.000000e+00> : vector<16xf32>
    %46 = vector.multi_reduction <add>, %45, %cst_26 [1] : vector<16x128xf32> to vector<16xf32>
    %47 = vector.shape_cast %46 : vector<16xf32> to vector<16x1xf32>
    %48 = tpu.reciprocal %47 {approx = true} : vector<16x1xf32> -> vector<16x1xf32>
    %49 = vector.broadcast %48 : vector<16x1xf32> to vector<16x128xf32>
    %50 = arith.mulf %45, %49 : vector<16x128xf32>
    %51 = arith.truncf %50 : vector<16x128xf32> to vector<16x128xbf16>
    %c0_27 = arith.constant 0 : index
    %c1 = arith.constant 1 : index
    %c0_28 = arith.constant 0 : index
    %c0_29 = arith.constant 0 : index
    %52 = vector.load %arg15[%c0_27, %c1, %c0_28, %c0_29] : memref<1x4x16x128xbf16, #tpu.memory_space<vmem>>, vector<1x1x16x128xbf16>
    %53 = vector.shape_cast %52 : vector<1x1x16x128xbf16> to vector<16x128xbf16>
    %54 = vector.shape_cast %51 : vector<16x128xbf16> to vector<1x1x16x128xbf16>
    tpu.vector_store %arg15[%c0_27, %c1, %c0_28, %c0_29], %54 {strides = array<i32>} : memref<1x4x16x128xbf16, #tpu.memory_space<vmem>>, vector<1x1x16x128xbf16>,
    %55 = arith.truncf %50 : vector<16x128xf32> to vector<16x128xbf16>
    %cst_30 = arith.constant dense<0.000000e+00> : vector<16x8xf32>
    %56 = tpu.matmul %55, %37, %cst_30 {dimension_numbers = #tpu.dot_dimension_numbers<[1], [0], [0], [1], [0, 0, 1, 1], [], []>} : vector<16x128xbf16>, vector<128x8xbf16>, vector<16x8xf32> -> vector<16x8xf32>
    %57 = arith.truncf %56 : vector<16x8xf32> to vector<16x8xbf16>
    %58 = vector.extract_strided_slice %10 {offsets = [0, 16], sizes = [16, 8], strides = [1, 1]} : vector<16x32xbf16> to vector<16x8xbf16>
    %c0_31 = arith.constant 0 : index
    %c16 = arith.constant 16 : index
    %59 = vector.load %arg16[%c0_31, %c16] : memref<128x32xbf16, #tpu.memory_space<vmem>>, vector<128x8xbf16>
    %c0_32 = arith.constant 0 : index
    %c16_33 = arith.constant 16 : index
    %60 = vector.load %arg17[%c0_32, %c16_33] : memref<128x32xbf16, #tpu.memory_space<vmem>>, vector<128x8xbf16>
    %cst_34 = arith.constant dense<0.000000e+00> : vector<16x128xf32>
    %61 = tpu.matmul %58, %59, %cst_34 {dimension_numbers = #tpu.dot_dimension_numbers<[1], [1], [0], [0], [0, 0, 1, 0], [], []>} : vector<16x8xbf16>, vector<128x8xbf16>, vector<16x128xf32> -> vector<16x128xf32>
    %62 = vector.broadcast %11 : vector<1x128xf32> to vector<16x128xf32>
    %63 = arith.addf %61, %62 : vector<16x128xf32>
    %cst_35 = arith.constant dense<0xFF800000> : vector<16xf32>
    %64 = vector.multi_reduction <maximumf>, %63, %cst_35 [1] : vector<16x128xf32> to vector<16xf32>
    %65 = vector.shape_cast %64 : vector<16xf32> to vector<16x1xf32>
    %66 = vector.broadcast %65 : vector<16x1xf32> to vector<16x128xf32>
    %67 = arith.subf %63, %66 : vector<16x128xf32>
    %68 = math.exp %67 : vector<16x128xf32>
    %cst_36 = arith.constant dense<0.000000e+00> : vector<16xf32>
    %69 = vector.multi_reduction <add>, %68, %cst_36 [1] : vector<16x128xf32> to vector<16xf32>
    %70 = vector.shape_cast %69 : vector<16xf32> to vector<16x1xf32>
    %71 = tpu.reciprocal %70 {approx = true} : vector<16x1xf32> -> vector<16x1xf32>
    %72 = vector.broadcast %71 : vector<16x1xf32> to vector<16x128xf32>
    %73 = arith.mulf %68, %72 : vector<16x128xf32>
    %74 = arith.truncf %73 : vector<16x128xf32> to vector<16x128xbf16>
    %c0_37 = arith.constant 0 : index
    %c2 = arith.constant 2 : index
    %c0_38 = arith.constant 0 : index
    %c0_39 = arith.constant 0 : index
    %75 = vector.load %arg15[%c0_37, %c2, %c0_38, %c0_39] : memref<1x4x16x128xbf16, #tpu.memory_space<vmem>>, vector<1x1x16x128xbf16>
    %76 = vector.shape_cast %75 : vector<1x1x16x128xbf16> to vector<16x128xbf16>
    %77 = vector.shape_cast %74 : vector<16x128xbf16> to vector<1x1x16x128xbf16>
    tpu.vector_store %arg15[%c0_37, %c2, %c0_38, %c0_39], %77 {strides = array<i32>} : memref<1x4x16x128xbf16, #tpu.memory_space<vmem>>, vector<1x1x16x128xbf16>,
    %78 = arith.truncf %73 : vector<16x128xf32> to vector<16x128xbf16>
    %cst_40 = arith.constant dense<0.000000e+00> : vector<16x8xf32>
    %79 = tpu.matmul %78, %60, %cst_40 {dimension_numbers = #tpu.dot_dimension_numbers<[1], [0], [0], [1], [0, 0, 1, 1], [], []>} : vector<16x128xbf16>, vector<128x8xbf16>, vector<16x8xf32> -> vector<16x8xf32>
    %80 = arith.truncf %79 : vector<16x8xf32> to vector<16x8xbf16>
    %81 = vector.extract_strided_slice %10 {offsets = [0, 24], sizes = [16, 8], strides = [1, 1]} : vector<16x32xbf16> to vector<16x8xbf16>
    %c0_41 = arith.constant 0 : index
    %c24 = arith.constant 24 : index
    %82 = vector.load %arg16[%c0_41, %c24] : memref<128x32xbf16, #tpu.memory_space<vmem>>, vector<128x8xbf16>
    %c0_42 = arith.constant 0 : index
    %c24_43 = arith.constant 24 : index
    %83 = vector.load %arg17[%c0_42, %c24_43] : memref<128x32xbf16, #tpu.memory_space<vmem>>, vector<128x8xbf16>
    %cst_44 = arith.constant dense<0.000000e+00> : vector<16x128xf32>
    %84 = tpu.matmul %81, %82, %cst_44 {dimension_numbers = #tpu.dot_dimension_numbers<[1], [1], [0], [0], [0, 0, 1, 0], [], []>} : vector<16x8xbf16>, vector<128x8xbf16>, vector<16x128xf32> -> vector<16x128xf32>
    %85 = vector.broadcast %11 : vector<1x128xf32> to vector<16x128xf32>
    %86 = arith.addf %84, %85 : vector<16x128xf32>
    %cst_45 = arith.constant dense<0xFF800000> : vector<16xf32>
    %87 = vector.multi_reduction <maximumf>, %86, %cst_45 [1] : vector<16x128xf32> to vector<16xf32>
    %88 = vector.shape_cast %87 : vector<16xf32> to vector<16x1xf32>
    %89 = vector.broadcast %88 : vector<16x1xf32> to vector<16x128xf32>
    %90 = arith.subf %86, %89 : vector<16x128xf32>
    %91 = math.exp %90 : vector<16x128xf32>
    %cst_46 = arith.constant dense<0.000000e+00> : vector<16xf32>
    %92 = vector.multi_reduction <add>, %91, %cst_46 [1] : vector<16x128xf32> to vector<16xf32>
    %93 = vector.shape_cast %92 : vector<16xf32> to vector<16x1xf32>
    %94 = tpu.reciprocal %93 {approx = true} : vector<16x1xf32> -> vector<16x1xf32>
    %95 = vector.broadcast %94 : vector<16x1xf32> to vector<16x128xf32>
    %96 = arith.mulf %91, %95 : vector<16x128xf32>
    %97 = arith.truncf %96 : vector<16x128xf32> to vector<16x128xbf16>
    %c0_47 = arith.constant 0 : index
    %c3 = arith.constant 3 : index
    %c0_48 = arith.constant 0 : index
    %c0_49 = arith.constant 0 : index
    %98 = vector.load %arg15[%c0_47, %c3, %c0_48, %c0_49] : memref<1x4x16x128xbf16, #tpu.memory_space<vmem>>, vector<1x1x16x128xbf16>
    %99 = vector.shape_cast %98 : vector<1x1x16x128xbf16> to vector<16x128xbf16>
    %100 = vector.shape_cast %97 : vector<16x128xbf16> to vector<1x1x16x128xbf16>
    tpu.vector_store %arg15[%c0_47, %c3, %c0_48, %c0_49], %100 {strides = array<i32>} : memref<1x4x16x128xbf16, #tpu.memory_space<vmem>>, vector<1x1x16x128xbf16>,
    %101 = arith.truncf %96 : vector<16x128xf32> to vector<16x128xbf16>
    %cst_50 = arith.constant dense<0.000000e+00> : vector<16x8xf32>
    %102 = tpu.matmul %101, %83, %cst_50 {dimension_numbers = #tpu.dot_dimension_numbers<[1], [0], [0], [1], [0, 0, 1, 1], [], []>} : vector<16x128xbf16>, vector<128x8xbf16>, vector<16x8xf32> -> vector<16x8xf32>
    %103 = arith.truncf %102 : vector<16x8xf32> to vector<16x8xbf16>
    %104 = tpu.concatenate %34, %57, %80, %103 in 1 : vector<16x8xbf16>, vector<16x8xbf16>, vector<16x8xbf16>, vector<16x8xbf16> -> vector<16x32xbf16>
    %c0_51 = arith.constant 0 : index
    %c0_52 = arith.constant 0 : index
    %105 = vector.load %arg11[%c0_51, %c0_52] : memref<32x32xbf16, #tpu.memory_space<vmem>>, vector<32x32xbf16>
    %cst_53 = arith.constant dense<0.000000e+00> : vector<16x32xf32>
    %106 = tpu.matmul %104, %105, %cst_53 {dimension_numbers = #tpu.dot_dimension_numbers<[1], [0], [0], [1], [0, 0, 1, 1], [], []>} : vector<16x32xbf16>, vector<32x32xbf16>, vector<16x32xf32> -> vector<16x32xf32>
    %c0_54 = arith.constant 0 : index
    %c0_55 = arith.constant 0 : index
    %107 = vector.load %arg12[%c0_54, %c0_55] : memref<1x32xf32, #tpu.memory_space<vmem>>, vector<1x32xf32>
    %108 = vector.broadcast %107 : vector<1x32xf32> to vector<16x32xf32>
    %109 = arith.addf %106, %108 : vector<16x32xf32>
    %c0_56 = arith.constant 0 : index
    %c0_57 = arith.constant 0 : index
    %c0_58 = arith.constant 0 : index
    %110 = vector.load %arg14[%c0_56, %c0_57, %c0_58] : memref<1x16x32xf32, #tpu.memory_space<vmem>>, vector<1x16x32xf32>
    %111 = vector.shape_cast %110 : vector<1x16x32xf32> to vector<16x32xf32>
    %112 = vector.shape_cast %109 : vector<16x32xf32> to vector<1x16x32xf32>
    tpu.vector_store %arg14[%c0_56, %c0_57, %c0_58], %112 {strides = array<i32>} : memref<1x16x32xf32, #tpu.memory_space<vmem>>, vector<1x16x32xf32>,
    return
  }
  func.func @transform_0(%arg0: i32, %arg1: i32) -> (i32, i32, i32) {
    %c0_i32 = arith.constant 0 : i32
    %c0_i32_0 = arith.constant 0 : i32
    return %arg0, %arg1, %c0_i32 : i32, i32, i32
  }
  func.func @transform_1(%arg0: i32, %arg1: i32) -> (i32, i32, i32) {
    %c0_i32 = arith.constant 0 : i32
    %c0_i32_0 = arith.constant 0 : i32
    %c0_i32_1 = arith.constant 0 : i32
    return %arg0, %c0_i32, %c0_i32_0 : i32, i32, i32
  }
  func.func @transform_2(%arg0: i32, %arg1: i32) -> (i32, i32, i32) {
    %c0_i32 = arith.constant 0 : i32
    %c0_i32_0 = arith.constant 0 : i32
    %c0_i32_1 = arith.constant 0 : i32
    return %arg0, %c0_i32, %c0_i32_0 : i32, i32, i32
  }
  func.func @transform_3(%arg0: i32, %arg1: i32) -> (i32, i32) {
    %c0_i32 = arith.constant 0 : i32
    %c0_i32_0 = arith.constant 0 : i32
    %c0_i32_1 = arith.constant 0 : i32
    return %c0_i32, %c0_i32_0 : i32, i32
  }
  func.func @transform_4(%arg0: i32, %arg1: i32) -> (i32, i32) {
    %c0_i32 = arith.constant 0 : i32
    %c0_i32_0 = arith.constant 0 : i32
    %c0_i32_1 = arith.constant 0 : i32
    return %c0_i32, %c0_i32_0 : i32, i32
  }
  func.func @transform_5(%arg0: i32, %arg1: i32) -> (i32, i32) {
    %c0_i32 = arith.constant 0 : i32
    %c0_i32_0 = arith.constant 0 : i32
    %c0_i32_1 = arith.constant 0 : i32
    return %c0_i32, %c0_i32_0 : i32, i32
  }
  func.func @transform_6(%arg0: i32, %arg1: i32) -> (i32, i32) {
    %c0_i32 = arith.constant 0 : i32
    %c0_i32_0 = arith.constant 0 : i32
    %c0_i32_1 = arith.constant 0 : i32
    return %c0_i32, %c0_i32_0 : i32, i32
  }
  func.func @transform_7(%arg0: i32, %arg1: i32) -> (i32, i32) {
    %c0_i32 = arith.constant 0 : i32
    %c0_i32_0 = arith.constant 0 : i32
    %c0_i32_1 = arith.constant 0 : i32
    return %c0_i32, %c0_i32_0 : i32, i32
  }
  func.func @transform_8(%arg0: i32, %arg1: i32) -> (i32, i32) {
    %c0_i32 = arith.constant 0 : i32
    %c0_i32_0 = arith.constant 0 : i32
    %c0_i32_1 = arith.constant 0 : i32
    return %c0_i32, %c0_i32_0 : i32, i32
  }
  func.func @transform_9(%arg0: i32, %arg1: i32) -> (i32, i32) {
    %c0_i32 = arith.constant 0 : i32
    %c0_i32_0 = arith.constant 0 : i32
    %c0_i32_1 = arith.constant 0 : i32
    return %c0_i32, %c0_i32_0 : i32, i32
  }
  func.func @transform_10(%arg0: i32, %arg1: i32) -> (i32, i32) {
    %c0_i32 = arith.constant 0 : i32
    %c0_i32_0 = arith.constant 0 : i32
    %c0_i32_1 = arith.constant 0 : i32
    return %c0_i32, %c0_i32_0 : i32, i32
  }
  func.func @transform_11(%arg0: i32, %arg1: i32) -> (i32, i32) {
    %c0_i32 = arith.constant 0 : i32
    %c0_i32_0 = arith.constant 0 : i32
    %c0_i32_1 = arith.constant 0 : i32
    return %c0_i32, %c0_i32_0 : i32, i32
  }
  func.func @transform_12(%arg0: i32, %arg1: i32) -> (i32, i32, i32) {
    %c0_i32 = arith.constant 0 : i32
    %c0_i32_0 = arith.constant 0 : i32
    return %arg0, %arg1, %c0_i32 : i32, i32, i32
  }
  func.func @transform_13(%arg0: i32, %arg1: i32) -> (i32, i32, i32, i32) {
    %c0_i32 = arith.constant 0 : i32
    %c0_i32_0 = arith.constant 0 : i32
    %c0_i32_1 = arith.constant 0 : i32
    return %arg0, %c0_i32, %arg1, %c0_i32_0 : i32, i32, i32, i32
  }
}

</mosaic_0001>

<llo_original>
// kernel: tpu_custom_call.1
$region0: #{tpu_custom_call.1}
  #allocation0 [shape = 'u32[]', space=smem, size = 0x4, offset = 0x4, fixed_abs, tag = 'smem constant byte address 0x4 - core index']
  #allocation1 [shape = 'u32[72,128]{1,0:T(1,128)}', space=vmem, size = 0x9000, scoped, tag = 'internal scratch']
  #allocation2 [shape = 'bf16[128,32]{1,0:T(8,128)(2,1)}', space=vmem, size = 0x8000, scoped, tag = 'scratch operand']
  #allocation3 [shape = 'bf16[128,32]{1,0:T(8,128)(2,1)}', space=vmem, size = 0x8000, scoped, tag = 'scratch operand']
  %s0 = inlined_call_operand.vmem [shape: bf16[2,16,32], index: 0, kind: input, shape index: {}]
  %s1 = inlined_call_operand.vmem [shape: bf16[2,128,32], index: 1, kind: input, shape index: {}]
  %s2 = inlined_call_operand.vmem [shape: bf16[2,128,32], index: 2, kind: input, shape index: {}]
  %s3 = inlined_call_operand.vmem [shape: bf16[32,32], index: 3, kind: input, shape index: {}]
  %s4 = inlined_call_operand.vmem [shape: f32[1,32], index: 4, kind: input, shape index: {}]
  %s5 = inlined_call_operand.vmem [shape: bf16[32,32], index: 5, kind: input, shape index: {}]
  %s6 = inlined_call_operand.vmem [shape: f32[1,32], index: 6, kind: input, shape index: {}]
  %s7 = inlined_call_operand.vmem [shape: bf16[32,32], index: 7, kind: input, shape index: {}]
  %s8 = inlined_call_operand.vmem [shape: f32[1,32], index: 8, kind: input, shape index: {}]
  %s9 = inlined_call_operand.vmem [shape: bf16[32,32], index: 9, kind: input, shape index: {}]
  %s10 = inlined_call_operand.vmem [shape: f32[1,32], index: 10, kind: input, shape index: {}]
  %s11 = inlined_call_operand.vmem [shape: f32[1,128], index: 11, kind: input, shape index: {}]
  %s12 = inlined_call_operand.hbm [shape: f32[2,16,32], index: 12, kind: output, shape index: {0}]
  %s13 = inlined_call_operand.hbm [shape: bf16[2,4,16,128], index: 13, kind: output, shape index: {1}]
  %14 = xla_tuple %s12, %s13
  %s15 = sld [smem:[#allocation0]]
  $region93: #{tpu_custom_call.1} parent=0
    _
  %s17 = ssub.s32 1, %s15
  %s18 = scalar_select 0, %s17, %s15
  $region1: #{tpu_custom_call.1} parent=0
    #allocation4 [shape = 'u8[16384]{0}', space=vmem, size = 0x4000, scoped, tag = 'output window, operand 0']
    #allocation5 [shape = 's32[2]{0}', space=sflag, size = 0x8, scoped, tag = 'scoped memory for tpu_custom_call.1']
    #allocation6 [shape = 'u8[32768]{0}', space=vmem, size = 0x8000, scoped, tag = 'output window, operand 1']
    #allocation7 [shape = 's32[2]{0}', space=sflag, size = 0x8, scoped, tag = 'scoped memory for tpu_custom_call.1']
    %19 = vsyncpa [#allocation5], 0
    %s20 = scalar_lea.sflag [#allocation5], 1
    %21 = vsyncpa %s20, 0
    %22 = vsyncpa [#allocation7], 0
    %s23 = scalar_lea.sflag [#allocation7], 1
    %24 = vsyncpa %s23, 0
    loop: start=0, step=1, limit=4
    $region2: #{tpu_custom_call.1} parent=1 // loop_pre_header
      _
    $region3: #{tpu_custom_call.1} parent=1 // loop_header
      %s26 = sphi 0, %s30
      %p27 = scmp.ge.s32.totalorder %s26, 4
      %s33 = sphi 0, %s45
      %s34 = sphi 0, %s41
      %s35 = sphi 0, %s33
      %s36 = sphi 0, %s34
      %s37 = sphi 0, %s35
      %s38 = sphi 0, %s36
      %s50 = sphi 0, %s52
      %s53 = sphi 0, %s50
      %s54 = sphi 0, %s53
      %s70 = sphi 0, %s54
      %s76 = sphi 0, %s78
      %s79 = sphi 0, %s76
      %s80 = sphi 0, %s79
      %s96 = sphi 0, %s80
      %s102 = sphi 0, %s104
      %s105 = sphi 0, %s102
      %s106 = sphi 0, %s105
      %s122 = sphi 0, %s106
      %s126 = sphi 0, %s126
      %s128 = sphi 0, %s126
      %s129 = sphi 0, %s128
      %s143 = sphi 0, %s129
      %s147 = sphi 0, %s147
      %s149 = sphi 0, %s147
      %s150 = sphi 0, %s149
      %s164 = sphi 0, %s150
      %s168 = sphi 0, %s168
      %s170 = sphi 0, %s168
      %s171 = sphi 0, %s170
      %s185 = sphi 0, %s171
      %s189 = sphi 0, %s189
      %s191 = sphi 0, %s189
      %s192 = sphi 0, %s191
      %s206 = sphi 0, %s192
      %s210 = sphi 0, %s210
      %s212 = sphi 0, %s210
      %s213 = sphi 0, %s212
      %s227 = sphi 0, %s213
      %s231 = sphi 0, %s231
      %s233 = sphi 0, %s231
      %s234 = sphi 0, %s233
      %s248 = sphi 0, %s234
      %s252 = sphi 0, %s252
      %s254 = sphi 0, %s252
      %s255 = sphi 0, %s254
      %s269 = sphi 0, %s255
      %s273 = sphi 0, %s273
      %s275 = sphi 0, %s273
      %s276 = sphi 0, %s275
      %s290 = sphi 0, %s276
      %s294 = sphi 0, %s294
      %s296 = sphi 0, %s294
      %s297 = sphi 0, %s296
      %s311 = sphi 0, %s297
      %s319 = sphi 0, %s321
      %s322 = sphi 0, %s319
      %s323 = sphi 0, %s322
      %s339 = sphi 0, %s323
      %s347 = sphi 0, %s349
      %s350 = sphi 0, %s347
      %s351 = sphi 0, %s350
      %s367 = sphi 0, %s351
    $region4: #{tpu_custom_call.1} parent=1 // loop_header_branch
      %29 = sbr.rel (%p27) target = $region8
    $region5: #{tpu_custom_call.1} parent=1 // loop_body
      %s31 = ssub.s32 %s26, 1
      %s32 = ssub.s32 %s26, 2
      %s39 = sadd.s32 1, %s34
      %p40 = scmp.ge.s32.totalorder %s39, 1
      %s41 = scalar_select %p40, 0, %s39
      %s42 = sadd.s32 1, %s33
      %s43 = scalar_select %p40, %s42, %s33
      %p44 = scmp.ge.s32.totalorder %s43, 2
      %s45 = scalar_select %p44, 0, %s43
      %s46 = ssub.s32 %s33, %s45
      %s47 = ssub.s32 %s34, %s41
      %s48 = sor.u32 %s46, %s47
      %p49 = scmp.eq.s32.totalorder %s48, 0
      %s51 = sadd.s32 %s50, 1
      %s52 = scalar_select %p49, %s50, %s51
      %p55 = pneg %p49
      %p56 = scmp.eq.s32.totalorder %s26, 1
      %p57 = por %p55, %p56
      %p58 = scmp.ne.s32.totalorder %s50, %s53
      %p59 = scmp.eq.s32.totalorder %s26, 0
      %p60 = por %p58, %p59
      %p61 = scmp.ne.s32.totalorder %s50, %s53
      %p62 = scmp.eq.s32.totalorder %s31, 1
      %p63 = por %p61, %p62
      %p64 = scmp.ne.s32.totalorder %s53, %s54
      %p65 = scmp.eq.s32.totalorder %s31, 0
      %p66 = por %p64, %p65
      %p67 = scmp.ne.s32.totalorder %s53, %s54
      %p68 = scmp.eq.s32.totalorder %s32, 1
      %p69 = por %p67, %p68
      %p71 = scmp.ne.s32.totalorder %s54, %s70
      %p72 = scmp.eq.s32.totalorder %s32, 0
      %p73 = por %p71, %p72
      %s74 = ssub.s32 %s33, %s45
      %p75 = scmp.eq.s32.totalorder %s74, 0
      %s77 = sadd.s32 %s76, 1
      %s78 = scalar_select %p75, %s76, %s77
      %p81 = pneg %p75
      %p82 = scmp.eq.s32.totalorder %s26, 1
      %p83 = por %p81, %p82
      %p84 = scmp.ne.s32.totalorder %s76, %s79
      %p85 = scmp.eq.s32.totalorder %s26, 0
      %p86 = por %p84, %p85
      %p87 = scmp.ne.s32.totalorder %s76, %s79
      %p88 = scmp.eq.s32.totalorder %s31, 1
      %p89 = por %p87, %p88
      %p90 = scmp.ne.s32.totalorder %s79, %s80
      %p91 = scmp.eq.s32.totalorder %s31, 0
      %p92 = por %p90, %p91
      %p93 = scmp.ne.s32.totalorder %s79, %s80
      %p94 = scmp.eq.s32.totalorder %s32, 1
      %p95 = por %p93, %p94
      %p97 = scmp.ne.s32.totalorder %s80, %s96
      %p98 = scmp.eq.s32.totalorder %s32, 0
      %p99 = por %p97, %p98
      %s100 = ssub.s32 %s33, %s45
      %p101 = scmp.eq.s32.totalorder %s100, 0
      %s103 = sadd.s32 %s102, 1
      %s104 = scalar_select %p101, %s102, %s103
      %p107 = pneg %p101
      %p108 = scmp.eq.s32.totalorder %s26, 1
      %p109 = por %p107, %p108
      %p110 = scmp.ne.s32.totalorder %s102, %s105
      %p111 = scmp.eq.s32.totalorder %s26, 0
      %p112 = por %p110, %p111
      %p113 = scmp.ne.s32.totalorder %s102, %s105
      %p114 = scmp.eq.s32.totalorder %s31, 1
      %p115 = por %p113, %p114
      %p116 = scmp.ne.s32.totalorder %s105, %s106
      %p117 = scmp.eq.s32.totalorder %s31, 0
      %p118 = por %p116, %p117
      %p119 = scmp.ne.s32.totalorder %s105, %s106
      %p120 = scmp.eq.s32.totalorder %s32, 1
      %p121 = por %p119, %p120
      %p123 = scmp.ne.s32.totalorder %s106, %s122
      %p124 = scmp.eq.s32.totalorder %s32, 0
      %p125 = por %p123, %p124
      %s127 = sadd.s32 %s126, 1
      %p130 = scmp.eq.s32.totalorder %s26, 1
      %p131 = scmp.ne.s32.totalorder %s126, %s128
      %p132 = scmp.eq.s32.totalorder %s26, 0
      %p133 = por %p131, %p132
      %p134 = scmp.ne.s32.totalorder %s126, %s128
      %p135 = scmp.eq.s32.totalorder %s31, 1
      %p136 = por %p134, %p135
      %p137 = scmp.ne.s32.totalorder %s128, %s129
      %p138 = scmp.eq.s32.totalorder %s31, 0
      %p139 = por %p137, %p138
      %p140 = scmp.ne.s32.totalorder %s128, %s129
      %p141 = scmp.eq.s32.totalorder %s32, 1
      %p142 = por %p140, %p141
      %p144 = scmp.ne.s32.totalorder %s129, %s143
      %p145 = scmp.eq.s32.totalorder %s32, 0
      %p146 = por %p144, %p145
      %s148 = sadd.s32 %s147, 1
      %p151 = scmp.eq.s32.totalorder %s26, 1
      %p152 = scmp.ne.s32.totalorder %s147, %s149
      %p153 = scmp.eq.s32.totalorder %s26, 0
      %p154 = por %p152, %p153
      %p155 = scmp.ne.s32.totalorder %s147, %s149
      %p156 = scmp.eq.s32.totalorder %s31, 1
      %p157 = por %p155, %p156
      %p158 = scmp.ne.s32.totalorder %s149, %s150
      %p159 = scmp.eq.s32.totalorder %s31, 0
      %p160 = por %p158, %p159
      %p161 = scmp.ne.s32.totalorder %s149, %s150
      %p162 = scmp.eq.s32.totalorder %s32, 1
      %p163 = por %p161, %p162
      %p165 = scmp.ne.s32.totalorder %s150, %s164
      %p166 = scmp.eq.s32.totalorder %s32, 0
      %p167 = por %p165, %p166
      %s169 = sadd.s32 %s168, 1
      %p172 = scmp.eq.s32.totalorder %s26, 1
      %p173 = scmp.ne.s32.totalorder %s168, %s170
      %p174 = scmp.eq.s32.totalorder %s26, 0
      %p175 = por %p173, %p174
      %p176 = scmp.ne.s32.totalorder %s168, %s170
      %p177 = scmp.eq.s32.totalorder %s31, 1
      %p178 = por %p176, %p177
      %p179 = scmp.ne.s32.totalorder %s170, %s171
      %p180 = scmp.eq.s32.totalorder %s31, 0
      %p181 = por %p179, %p180
      %p182 = scmp.ne.s32.totalorder %s170, %s171
      %p183 = scmp.eq.s32.totalorder %s32, 1
      %p184 = por %p182, %p183
      %p186 = scmp.ne.s32.totalorder %s171, %s185
      %p187 = scmp.eq.s32.totalorder %s32, 0
      %p188 = por %p186, %p187
      %s190 = sadd.s32 %s189, 1
      %p193 = scmp.eq.s32.totalorder %s26, 1
      %p194 = scmp.ne.s32.totalorder %s189, %s191
      %p195 = scmp.eq.s32.totalorder %s26, 0
      %p196 = por %p194, %p195
      %p197 = scmp.ne.s32.totalorder %s189, %s191
      %p198 = scmp.eq.s32.totalorder %s31, 1
      %p199 = por %p197, %p198
      %p200 = scmp.ne.s32.totalorder %s191, %s192
      %p201 = scmp.eq.s32.totalorder %s31, 0
      %p202 = por %p200, %p201
      %p203 = scmp.ne.s32.totalorder %s191, %s192
      %p204 = scmp.eq.s32.totalorder %s32, 1
      %p205 = por %p203, %p204
      %p207 = scmp.ne.s32.totalorder %s192, %s206
      %p208 = scmp.eq.s32.totalorder %s32, 0
      %p209 = por %p207, %p208
      %s211 = sadd.s32 %s210, 1
      %p214 = scmp.eq.s32.totalorder %s26, 1
      %p215 = scmp.ne.s32.totalorder %s210, %s212
      %p216 = scmp.eq.s32.totalorder %s26, 0
      %p217 = por %p215, %p216
      %p218 = scmp.ne.s32.totalorder %s210, %s212
      %p219 = scmp.eq.s32.totalorder %s31, 1
      %p220 = por %p218, %p219
      %p221 = scmp.ne.s32.totalorder %s212, %s213
      %p222 = scmp.eq.s32.totalorder %s31, 0
      %p223 = por %p221, %p222
      %p224 = scmp.ne.s32.totalorder %s212, %s213
      %p225 = scmp.eq.s32.totalorder %s32, 1
      %p226 = por %p224, %p225
      %p228 = scmp.ne.s32.totalorder %s213, %s227
      %p229 = scmp.eq.s32.totalorder %s32, 0
      %p230 = por %p228, %p229
      %s232 = sadd.s32 %s231, 1
      %p235 = scmp.eq.s32.totalorder %s26, 1
      %p236 = scmp.ne.s32.totalorder %s231, %s233
      %p237 = scmp.eq.s32.totalorder %s26, 0
      %p238 = por %p236, %p237
      %p239 = scmp.ne.s32.totalorder %s231, %s233
      %p240 = scmp.eq.s32.totalorder %s31, 1
      %p241 = por %p239, %p240
      %p242 = scmp.ne.s32.totalorder %s233, %s234
      %p243 = scmp.eq.s32.totalorder %s31, 0
      %p244 = por %p242, %p243
      %p245 = scmp.ne.s32.totalorder %s233, %s234
      %p246 = scmp.eq.s32.totalorder %s32, 1
      %p247 = por %p245, %p246
      %p249 = scmp.ne.s32.totalorder %s234, %s248
      %p250 = scmp.eq.s32.totalorder %s32, 0
      %p251 = por %p249, %p250
      %s253 = sadd.s32 %s252, 1
      %p256 = scmp.eq.s32.totalorder %s26, 1
      %p257 = scmp.ne.s32.totalorder %s252, %s254
      %p258 = scmp.eq.s32.totalorder %s26, 0
      %p259 = por %p257, %p258
      %p260 = scmp.ne.s32.totalorder %s252, %s254
      %p261 = scmp.eq.s32.totalorder %s31, 1
      %p262 = por %p260, %p261
      %p263 = scmp.ne.s32.totalorder %s254, %s255
      %p264 = scmp.eq.s32.totalorder %s31, 0
      %p265 = por %p263, %p264
      %p266 = scmp.ne.s32.totalorder %s254, %s255
      %p267 = scmp.eq.s32.totalorder %s32, 1
      %p268 = por %p266, %p267
      %p270 = scmp.ne.s32.totalorder %s255, %s269
      %p271 = scmp.eq.s32.totalorder %s32, 0
      %p272 = por %p270, %p271
      %s274 = sadd.s32 %s273, 1
      %p277 = scmp.eq.s32.totalorder %s26, 1
      %p278 = scmp.ne.s32.totalorder %s273, %s275
      %p279 = scmp.eq.s32.totalorder %s26, 0
      %p280 = por %p278, %p279
      %p281 = scmp.ne.s32.totalorder %s273, %s275
      %p282 = scmp.eq.s32.totalorder %s31, 1
      %p283 = por %p281, %p282
      %p284 = scmp.ne.s32.totalorder %s275, %s276
      %p285 = scmp.eq.s32.totalorder %s31, 0
      %p286 = por %p284, %p285
      %p287 = scmp.ne.s32.totalorder %s275, %s276
      %p288 = scmp.eq.s32.totalorder %s32, 1
      %p289 = por %p287, %p288
      %p291 = scmp.ne.s32.totalorder %s276, %s290
      %p292 = scmp.eq.s32.totalorder %s32, 0
      %p293 = por %p291, %p292
      %s295 = sadd.s32 %s294, 1
      %p298 = scmp.eq.s32.totalorder %s26, 1
      %p299 = scmp.ne.s32.totalorder %s294, %s296
      %p300 = scmp.eq.s32.totalorder %s26, 0
      %p301 = por %p299, %p300
      %p302 = scmp.ne.s32.totalorder %s294, %s296
      %p303 = scmp.eq.s32.totalorder %s31, 1
      %p304 = por %p302, %p303
      %p305 = scmp.ne.s32.totalorder %s296, %s297
      %p306 = scmp.eq.s32.totalorder %s31, 0
      %p307 = por %p305, %p306
      %p308 = scmp.ne.s32.totalorder %s296, %s297
      %p309 = scmp.eq.s32.totalorder %s32, 1
      %p310 = por %p308, %p309
      %p312 = scmp.ne.s32.totalorder %s297, %s311
      %p313 = scmp.eq.s32.totalorder %s32, 0
      %p314 = por %p312, %p313
      %s315 = ssub.s32 %s33, %s45
      %s316 = ssub.s32 %s34, %s41
      %s317 = sor.u32 %s315, %s316
      %p318 = scmp.eq.s32.totalorder %s317, 0
      %s320 = sadd.s32 %s319, 1
      %s321 = scalar_select %p318, %s319, %s320
      %p324 = pneg %p318
      %p325 = scmp.eq.s32.totalorder %s26, 1
      %p326 = por %p324, %p325
      %p327 = scmp.ne.s32.totalorder %s319, %s322
      %p328 = scmp.eq.s32.totalorder %s26, 0
      %p329 = por %p327, %p328
      %p330 = scmp.ne.s32.totalorder %s319, %s322
      %p331 = scmp.eq.s32.totalorder %s31, 1
      %p332 = por %p330, %p331
      %p333 = scmp.ne.s32.totalorder %s322, %s323
      %p334 = scmp.eq.s32.totalorder %s31, 0
      %p335 = por %p333, %p334
      %p336 = scmp.ne.s32.totalorder %s322, %s323
      %p337 = scmp.eq.s32.totalorder %s32, 1
      %p338 = por %p336, %p337
      %p340 = scmp.ne.s32.totalorder %s323, %s339
      %p341 = scmp.eq.s32.totalorder %s32, 0
      %p342 = por %p340, %p341
      %s343 = ssub.s32 %s33, %s45
      %s344 = ssub.s32 %s34, %s41
      %s345 = sor.u32 %s343, %s344
      %p346 = scmp.eq.s32.totalorder %s345, 0
      %s348 = sadd.s32 %s347, 1
      %s349 = scalar_select %p346, %s347, %s348
      %p352 = pneg %p346
      %p353 = scmp.eq.s32.totalorder %s26, 1
      %p354 = por %p352, %p353
      %p355 = scmp.ne.s32.totalorder %s347, %s350
      %p356 = scmp.eq.s32.totalorder %s26, 0
      %p357 = por %p355, %p356
      %p358 = scmp.ne.s32.totalorder %s347, %s350
      %p359 = scmp.eq.s32.totalorder %s31, 1
      %p360 = por %p358, %p359
      %p361 = scmp.ne.s32.totalorder %s350, %s351
      %p362 = scmp.eq.s32.totalorder %s31, 0
      %p363 = por %p361, %p362
      %p364 = scmp.ne.s32.totalorder %s350, %s351
      %p365 = scmp.eq.s32.totalorder %s32, 1
      %p366 = por %p364, %p365
      %p368 = scmp.ne.s32.totalorder %s351, %s367
      %p369 = scmp.eq.s32.totalorder %s32, 0
      %p370 = por %p368, %p369
      %p371 = scmp.le.s32.totalorder 1, %s26
      %p372 = scmp.lt.s32.totalorder %s26, 3
      %p373 = pnand %p371, %p372
      %p374 = pneg %p373
      // Predicated region
      $region9: #{tpu_custom_call.1} parent=5 // pred_check
        _
      $region10: #{tpu_custom_call.1} parent=5 // pred_check_branch
        %376 = sbr.rel (%p373) target = $region12
      $region11: #{tpu_custom_call.1} parent=5 // pred_region
        %s377 = ssub.s32 %s26, 1
        // Predicated region
        $region13: #{tpu_custom_call.1} parent=11 // pred_check
          %p378 = pneg %p139
        $region14: #{tpu_custom_call.1} parent=11 // pred_check_branch
          %380 = sbr.rel (%p378) target = $region16
        $region15: #{tpu_custom_call.1} parent=11 // pred_region
          _
        $region16: #{tpu_custom_call.1} parent=11 // pred_fallthru
          _
        // Predicated region
        $region17: #{tpu_custom_call.1} parent=11 // pred_check
          %p381 = pneg %p160
        $region18: #{tpu_custom_call.1} parent=11 // pred_check_branch
          %383 = sbr.rel (%p381) target = $region20
        $region19: #{tpu_custom_call.1} parent=11 // pred_region
          _
        $region20: #{tpu_custom_call.1} parent=11 // pred_fallthru
          _
        // Predicated region
        $region21: #{tpu_custom_call.1} parent=11 // pred_check
          %p384 = pneg %p181
        $region22: #{tpu_custom_call.1} parent=11 // pred_check_branch
          %386 = sbr.rel (%p384) target = $region24
        $region23: #{tpu_custom_call.1} parent=11 // pred_region
          _
        $region24: #{tpu_custom_call.1} parent=11 // pred_fallthru
          _
        // Predicated region
        $region25: #{tpu_custom_call.1} parent=11 // pred_check
          %p387 = pneg %p202
        $region26: #{tpu_custom_call.1} parent=11 // pred_check_branch
          %389 = sbr.rel (%p387) target = $region28
        $region27: #{tpu_custom_call.1} parent=11 // pred_region
          _
        $region28: #{tpu_custom_call.1} parent=11 // pred_fallthru
          _
        // Predicated region
        $region29: #{tpu_custom_call.1} parent=11 // pred_check
          %p390 = pneg %p223
        $region30: #{tpu_custom_call.1} parent=11 // pred_check_branch
          %392 = sbr.rel (%p390) target = $region32
        $region31: #{tpu_custom_call.1} parent=11 // pred_region
          _
        $region32: #{tpu_custom_call.1} parent=11 // pred_fallthru
          _
        // Predicated region
        $region33: #{tpu_custom_call.1} parent=11 // pred_check
          %p393 = pneg %p244
        $region34: #{tpu_custom_call.1} parent=11 // pred_check_branch
          %395 = sbr.rel (%p393) target = $region36
        $region35: #{tpu_custom_call.1} parent=11 // pred_region
          _
        $region36: #{tpu_custom_call.1} parent=11 // pred_fallthru
          _
        // Predicated region
        $region37: #{tpu_custom_call.1} parent=11 // pred_check
          %p396 = pneg %p265
        $region38: #{tpu_custom_call.1} parent=11 // pred_check_branch
          %398 = sbr.rel (%p396) target = $region40
        $region39: #{tpu_custom_call.1} parent=11 // pred_region
          _
        $region40: #{tpu_custom_call.1} parent=11 // pred_fallthru
          _
        // Predicated region
        $region41: #{tpu_custom_call.1} parent=11 // pred_check
          %p399 = pneg %p286
        $region42: #{tpu_custom_call.1} parent=11 // pred_check_branch
          %401 = sbr.rel (%p399) target = $region44
        $region43: #{tpu_custom_call.1} parent=11 // pred_region
          _
        $region44: #{tpu_custom_call.1} parent=11 // pred_fallthru
          _
        // Predicated region
        $region45: #{tpu_custom_call.1} parent=11 // pred_check
          %p402 = pneg %p307
        $region46: #{tpu_custom_call.1} parent=11 // pred_check_branch
          %404 = sbr.rel (%p402) target = $region48
        $region47: #{tpu_custom_call.1} parent=11 // pred_region
          _
        $region48: #{tpu_custom_call.1} parent=11 // pred_fallthru
          _
      $region12: #{tpu_custom_call.1} parent=5 // pred_fallthru
        _
      %p405 = scmp.lt.s32.totalorder %s26, 2
      // Predicated region
      $region49: #{tpu_custom_call.1} parent=5 // pred_check
        %p406 = pneg %p405
      $region50: #{tpu_custom_call.1} parent=5 // pred_check_branch
        %408 = sbr.rel (%p406) target = $region52
      $region51: #{tpu_custom_call.1} parent=5 // pred_region
        // Predicated region
        $region53: #{tpu_custom_call.1} parent=51 // pred_check
          %p409 = pneg %p60
        $region54: #{tpu_custom_call.1} parent=51 // pred_check_branch
          %411 = sbr.rel (%p409) target = $region56
        $region55: #{tpu_custom_call.1} parent=51 // pred_region
          %s412 = smul.u32 2, %s34
          %p413 = scmp.lt.s32.totalorder %s33, 1
          %s414 = scalar_select %p413, %s33, 1
          %p415 = scmp.lt.s32.totalorder %s412, 1
          %s416 = scalar_select %p415, %s412, 1
          %s417 = smul.addr %s414, 2
          %s418 = sadd.s32 %s416, %s417
          %s419 = smul.addr %s418, 4
          %s420 = scalar_lea.vmem %s0, %s419
          %s421 = smul.u32 2, %s34
        $region56: #{tpu_custom_call.1} parent=51 // pred_fallthru
          _
        // Predicated region
        $region57: #{tpu_custom_call.1} parent=51 // pred_check
          %p422 = pneg %p86
        $region58: #{tpu_custom_call.1} parent=51 // pred_check_branch
          %424 = sbr.rel (%p422) target = $region60
        $region59: #{tpu_custom_call.1} parent=51 // pred_region
          %p425 = scmp.lt.s32.totalorder %s33, 1
          %s426 = scalar_select %p425, %s33, 1
          %s427 = smul.addr %s426, 16
          %s428 = smul.addr %s427, 4
          %s429 = scalar_lea.vmem %s1, %s428
        $region60: #{tpu_custom_call.1} parent=51 // pred_fallthru
          _
        // Predicated region
        $region61: #{tpu_custom_call.1} parent=51 // pred_check
          %p430 = pneg %p112
        $region62: #{tpu_custom_call.1} parent=51 // pred_check_branch
          %432 = sbr.rel (%p430) target = $region64
        $region63: #{tpu_custom_call.1} parent=51 // pred_region
          %p433 = scmp.lt.s32.totalorder %s33, 1
          %s434 = scalar_select %p433, %s33, 1
          %s435 = smul.addr %s434, 16
          %s436 = smul.addr %s435, 4
          %s437 = scalar_lea.vmem %s2, %s436
        $region64: #{tpu_custom_call.1} parent=51 // pred_fallthru
          _
      $region52: #{tpu_custom_call.1} parent=5 // pred_fallthru
        _
      %p438 = scmp.le.s32.totalorder 1, %s26
      %p439 = scmp.lt.s32.totalorder %s26, 3
      %p440 = pnand %p438, %p439
      %p441 = pneg %p440
      // Predicated region
      $region65: #{tpu_custom_call.1} parent=5 // pred_check
        _
      $region66: #{tpu_custom_call.1} parent=5 // pred_check_branch
        %443 = sbr.rel (%p440) target = $region68
      $region67: #{tpu_custom_call.1} parent=5 // pred_region
        %s444 = ssub.s32 %s26, 1
        %s445 = smul.u32 2, %s36
        %p446 = scmp.lt.s32.totalorder %s35, 1
        %s447 = scalar_select %p446, %s35, 1
        %p448 = scmp.lt.s32.totalorder %s445, 1
        %s449 = scalar_select %p448, %s445, 1
        %s450 = smul.addr %s447, 2
        %s451 = sadd.s32 %s449, %s450
        %s452 = smul.addr %s451, 4
        %s453 = scalar_lea.vmem %s0, %s452
        %p454 = pneg %p66
        %p455 = pneg %p63
        %p456 = scmp.lt.s32.totalorder %s35, 1
        %s457 = scalar_select %p456, %s35, 1
        %s458 = smul.addr %s457, 16
        %s459 = smul.addr %s458, 4
        %s460 = scalar_lea.vmem %s1, %s459
        %p461 = pneg %p92
        %p462 = pneg %p89
        %p463 = scmp.lt.s32.totalorder %s35, 1
        %s464 = scalar_select %p463, %s35, 1
        %s465 = smul.addr %s464, 16
        %s466 = smul.addr %s465, 4
        %s467 = scalar_lea.vmem %s2, %s466
        %p468 = pneg %p118
        %p469 = pneg %p115
        %p470 = pneg %p139
        %p471 = pneg %p136
        %p472 = pneg %p160
        %p473 = pneg %p157
        %p474 = pneg %p181
        %p475 = pneg %p178
        %p476 = pneg %p202
        %p477 = pneg %p199
        %p478 = pneg %p223
        %p479 = pneg %p220
        %p480 = pneg %p244
        %p481 = pneg %p241
        %p482 = pneg %p265
        %p483 = pneg %p262
        %p484 = pneg %p286
        %p485 = pneg %p283
        %p486 = pneg %p307
        %p487 = pneg %p304
        %p488 = pneg %p335
        %p489 = pneg %p332
        %s490 = sand.u32 %s322, 1
        %s491 = scalar_lea.sflag [#allocation5], %s490
        %s492 = sand.u32 %s322, 1
        %s493 = smul.addr %s492, 16
        %s494 = scalar_lea.vmem [#allocation4], %s493
        %p495 = pneg %p363
        %p496 = pneg %p360
        %s497 = sand.u32 %s350, 1
        %s498 = scalar_lea.sflag [#allocation7], %s497
        %s499 = sand.u32 %s350, 1
        %s500 = smul.addr %s499, 32
        %s501 = scalar_lea.vmem [#allocation6], %s500
        %s502 = smul.u32 2, %s36
        %p503 = scmp.lt.s32.totalorder %s35, 1
        %s504 = scalar_select %p503, %s35, 1
        %p505 = scmp.lt.s32.totalorder %s502, 1
        %s506 = scalar_select %p505, %s502, 1
        %s507 = smul.addr %s504, 2
        %s508 = sadd.s32 %s506, %s507
        %s509 = smul.addr %s508, 4
        %s510 = scalar_lea.vmem %s0, %s509
        %s511 = smul.u32 2, %s36
        %p512 = scmp.lt.s32.totalorder %s35, 1
        %s513 = scalar_select %p512, %s35, 1
        %s514 = smul.addr %s513, 16
        %s515 = smul.addr %s514, 4
        %s516 = scalar_lea.vmem %s1, %s515
        %p517 = scmp.lt.s32.totalorder %s35, 1
        %s518 = scalar_select %p517, %s35, 1
        %s519 = smul.addr %s518, 16
        %s520 = smul.addr %s519, 4
        %s521 = scalar_lea.vmem %s2, %s520
        %s522 = smul.u32 2, %s36
        %s523 = smul.u32 2, %s36
        %p525 = scmp.eq.s32.totalorder %s36, 0
        // Predicated region
        $region69: #{tpu_custom_call.1} parent=67 // pred_check
          %p526 = pneg %p525
        $region70: #{tpu_custom_call.1} parent=67 // pred_check_branch
          %528 = sbr.rel (%p526) target = $region72
        $region71: #{tpu_custom_call.1} parent=67 // pred_region
          %v529 = vld [vmem:[%s516] sm:$0xf]
          %v530 = vld [vmem:[%s516 + $0x4] sm:$0xf]
          %v531 = vld [vmem:[%s516 + $0x8] sm:$0xf]
          %v532 = vld [vmem:[%s516 + $0xc] sm:$0xf]
          %v533 = vld [vmem:[%s516 + $0x10] sm:$0xf]
          %v534 = vld [vmem:[%s516 + $0x14] sm:$0xf]
          %v535 = vld [vmem:[%s516 + $0x18] sm:$0xf]
          %v536 = vld [vmem:[%s516 + $0x1c] sm:$0xf]
          %v537 = vld [vmem:[%s516 + $0x20] sm:$0xf]
          %v538 = vld [vmem:[%s516 + $0x24] sm:$0xf]
          %v539 = vld [vmem:[%s516 + $0x28] sm:$0xf]
          %v540 = vld [vmem:[%s516 + $0x2c] sm:$0xf]
          %v541 = vld [vmem:[%s516 + $0x30] sm:$0xf]
          %v542 = vld [vmem:[%s516 + $0x34] sm:$0xf]
          %v543 = vld [vmem:[%s516 + $0x38] sm:$0xf]
          %v544 = vld [vmem:[%s516 + $0x3c] sm:$0xf]
          %v545 = vld [vmem:[%s521] sm:$0xf]
          %v546 = vld [vmem:[%s521 + $0x4] sm:$0xf]
          %v547 = vld [vmem:[%s521 + $0x8] sm:$0xf]
          %v548 = vld [vmem:[%s521 + $0xc] sm:$0xf]
          %v549 = vld [vmem:[%s521 + $0x10] sm:$0xf]
          %v550 = vld [vmem:[%s521 + $0x14] sm:$0xf]
          %v551 = vld [vmem:[%s521 + $0x18] sm:$0xf]
          %v552 = vld [vmem:[%s521 + $0x1c] sm:$0xf]
          %v553 = vld [vmem:[%s521 + $0x20] sm:$0xf]
          %v554 = vld [vmem:[%s521 + $0x24] sm:$0xf]
          %v555 = vld [vmem:[%s521 + $0x28] sm:$0xf]
          %v556 = vld [vmem:[%s521 + $0x2c] sm:$0xf]
          %v557 = vld [vmem:[%s521 + $0x30] sm:$0xf]
          %v558 = vld [vmem:[%s521 + $0x34] sm:$0xf]
          %v559 = vld [vmem:[%s521 + $0x38] sm:$0xf]
          %v560 = vld [vmem:[%s521 + $0x3c] sm:$0xf]
          %v561 = vld [vmem:[%s5] sm:$0xf]
          %v562 = vld [vmem:[%s5 + $0x4] sm:$0xf]
          %v563 = vld [vmem:[%s5 + $0x8] sm:$0xf]
          %v564 = vld [vmem:[%s5 + $0xc] sm:$0xf]
          %v565 = vld [vmem:[%s6] sm:$0x1]
          %v567 = vperm.slane %v565, 0
          %v585 = vunpack.c.l.b16 %v529
          %v586 = vunpack.c.l.b16 %v530
          %v587 = vunpack.c.l.b16 %v531
          %v588 = vunpack.c.l.b16 %v532
          %v589 = vunpack.c.l.b16 %v533
          %v590 = vunpack.c.l.b16 %v534
          %v591 = vunpack.c.l.b16 %v535
          %v592 = vunpack.c.l.b16 %v536
          %v593 = vunpack.c.l.b16 %v537
          %v594 = vunpack.c.l.b16 %v538
          %v595 = vunpack.c.l.b16 %v539
          %v596 = vunpack.c.l.b16 %v540
          %v597 = vunpack.c.l.b16 %v541
          %v598 = vunpack.c.l.b16 %v542
          %v599 = vunpack.c.l.b16 %v543
          %v600 = vunpack.c.l.b16 %v544
          %v601 = vpack.c.b16 %v586, %v585
          %v602 = vpack.c.b16 %v588, %v587
          %v603 = vpack.c.b16 %v590, %v589
          %v604 = vpack.c.b16 %v592, %v591
          %v605 = vpack.c.b16 %v594, %v593
          %v606 = vpack.c.b16 %v596, %v595
          %v607 = vpack.c.b16 %v598, %v597
          %v608 = vpack.c.b16 %v600, %v599
          %v613 = vunpack.c.l.b16 %v561
          %v614 = vunpack.c.l.b16 %v562
          %v615 = vunpack.c.l.b16 %v563
          %v616 = vunpack.c.l.b16 %v564
          %v617 = vpack.c.b16 %v614, %v613
          %v618 = vpack.c.b16 %v616, %v615
          %vm621 = vcmask 261120
          %v623 = vsel %vm621, %v601, 0
          %v626 = vsel %vm621, %v602, 0
          %v629 = vsel %vm621, %v603, 0
          %v632 = vsel %vm621, %v604, 0
          %v635 = vsel %vm621, %v605, 0
          %v638 = vsel %vm621, %v606, 0
          %v641 = vsel %vm621, %v607, 0
          %v644 = vsel %vm621, %v608, 0
          %646 = vmatpush.bf16.msra.mxu0 0
          %647 = vmatpush.bf16.msra.mxu0 0
          %648 = vmatpush.bf16.msra.mxu0 0
          %649 = vmatpush.bf16.msra.mxu0 0
          %650 = vmatpush.bf16.msra.mxu0 0
          %651 = vmatpush.bf16.msra.mxu0 0
          %652 = vmatpush.bf16.msra.mxu0 %v618
          %653 = vmatpush.bf16.msra.mxu0 %v617
          %654 = vmatmul.bf16.gmra.mxu0 %v623
          %v655 = vpop.f32.mrf.mxu0
          %v656 = vadd.f32 %v567, %v655
          %v657 = vpop.f32.mrf.mxu0
          %v658 = vadd.f32 %v567, %v657
          %659 = vmatmul.bf16.gmra.mxu0 %v626
          %v660 = vpop.f32.mrf.mxu0
          %v661 = vadd.f32 %v567, %v660
          %v662 = vpop.f32.mrf.mxu0
          %v663 = vadd.f32 %v567, %v662
          %664 = vmatmul.bf16.gmra.mxu0 %v629
          %v665 = vpop.f32.mrf.mxu0
          %v666 = vadd.f32 %v567, %v665
          %v667 = vpop.f32.mrf.mxu0
          %v668 = vadd.f32 %v567, %v667
          %669 = vmatmul.bf16.gmra.mxu0 %v632
          %v670 = vpop.f32.mrf.mxu0
          %v671 = vadd.f32 %v567, %v670
          %v672 = vpop.f32.mrf.mxu0
          %v673 = vadd.f32 %v567, %v672
          %674 = vmatmul.bf16.gmra.mxu0 %v635
          %v675 = vpop.f32.mrf.mxu0
          %v676 = vadd.f32 %v567, %v675
          %v677 = vpop.f32.mrf.mxu0
          %v678 = vadd.f32 %v567, %v677
          %679 = vmatmul.bf16.gmra.mxu0 %v638
          %v680 = vpop.f32.mrf.mxu0
          %v681 = vadd.f32 %v567, %v680
          %v682 = vpop.f32.mrf.mxu0
          %v683 = vadd.f32 %v567, %v682
          %684 = vmatmul.bf16.gmra.mxu0 %v641
          %v685 = vpop.f32.mrf.mxu0
          %v686 = vadd.f32 %v567, %v685
          %v687 = vpop.f32.mrf.mxu0
          %v688 = vadd.f32 %v567, %v687
          %689 = vmatmul.bf16.gmra.mxu0 %v644
          %v690 = vpop.f32.mrf.mxu0
          %v691 = vadd.f32 %v567, %v690
          %v692 = vpop.f32.mrf.mxu0
          %v693 = vadd.f32 %v567, %v692
          %694 = vdwg.mxu0
          %v695 = vpack.c.bf16 %v656, %v656
          %v696 = vpack.c.bf16 %v658, %v658
          %v697 = vpack.c.bf16 %v661, %v661
          %v698 = vpack.c.bf16 %v663, %v663
          %v699 = vpack.c.bf16 %v666, %v666
          %v700 = vpack.c.bf16 %v668, %v668
          %v701 = vpack.c.bf16 %v671, %v671
          %v702 = vpack.c.bf16 %v673, %v673
          %v703 = vpack.c.bf16 %v676, %v676
          %v704 = vpack.c.bf16 %v678, %v678
          %v705 = vpack.c.bf16 %v681, %v681
          %v706 = vpack.c.bf16 %v683, %v683
          %v707 = vpack.c.bf16 %v686, %v686
          %v708 = vpack.c.bf16 %v688, %v688
          %v709 = vpack.c.bf16 %v691, %v691
          %v710 = vpack.c.bf16 %v693, %v693
          %vm711 = vcmask 257024
          %712 = vst.msk [vmem:[#allocation2] sm:$0xf] %vm711, %v695
          %713 = vst.msk [vmem:[#allocation2 + $0x4] sm:$0xf] %vm711, %v696
          %714 = vst.msk [vmem:[#allocation2 + $0x8] sm:$0xf] %vm711, %v697
          %715 = vst.msk [vmem:[#allocation2 + $0xc] sm:$0xf] %vm711, %v698
          %716 = vst.msk [vmem:[#allocation2 + $0x10] sm:$0xf] %vm711, %v699
          %717 = vst.msk [vmem:[#allocation2 + $0x14] sm:$0xf] %vm711, %v700
          %718 = vst.msk [vmem:[#allocation2 + $0x18] sm:$0xf] %vm711, %v701
          %719 = vst.msk [vmem:[#allocation2 + $0x1c] sm:$0xf] %vm711, %v702
          %720 = vst.msk [vmem:[#allocation2 + $0x20] sm:$0xf] %vm711, %v703
          %721 = vst.msk [vmem:[#allocation2 + $0x24] sm:$0xf] %vm711, %v704
          %722 = vst.msk [vmem:[#allocation2 + $0x28] sm:$0xf] %vm711, %v705
          %723 = vst.msk [vmem:[#allocation2 + $0x2c] sm:$0xf] %vm711, %v706
          %724 = vst.msk [vmem:[#allocation2 + $0x30] sm:$0xf] %vm711, %v707
          %725 = vst.msk [vmem:[#allocation2 + $0x34] sm:$0xf] %vm711, %v708
          %726 = vst.msk [vmem:[#allocation2 + $0x38] sm:$0xf] %vm711, %v709
          %727 = vst.msk [vmem:[#allocation2 + $0x3c] sm:$0xf] %vm711, %v710
          %v728 = vld [vmem:[%s7] sm:$0xf]
          %v729 = vld [vmem:[%s7 + $0x4] sm:$0xf]
          %v730 = vld [vmem:[%s7 + $0x8] sm:$0xf]
          %v731 = vld [vmem:[%s7 + $0xc] sm:$0xf]
          %v732 = vld [vmem:[%s8] sm:$0x1]
          %v734 = vperm.slane %v732, 0
          %v752 = vunpack.c.l.b16 %v545
          %v753 = vunpack.c.l.b16 %v546
          %v754 = vunpack.c.l.b16 %v547
          %v755 = vunpack.c.l.b16 %v548
          %v756 = vunpack.c.l.b16 %v549
          %v757 = vunpack.c.l.b16 %v550
          %v758 = vunpack.c.l.b16 %v551
          %v759 = vunpack.c.l.b16 %v552
          %v760 = vunpack.c.l.b16 %v553
          %v761 = vunpack.c.l.b16 %v554
          %v762 = vunpack.c.l.b16 %v555
          %v763 = vunpack.c.l.b16 %v556
          %v764 = vunpack.c.l.b16 %v557
          %v765 = vunpack.c.l.b16 %v558
          %v766 = vunpack.c.l.b16 %v559
          %v767 = vunpack.c.l.b16 %v560
          %v768 = vpack.c.b16 %v753, %v752
          %v769 = vpack.c.b16 %v755, %v754
          %v770 = vpack.c.b16 %v757, %v756
          %v771 = vpack.c.b16 %v759, %v758
          %v772 = vpack.c.b16 %v761, %v760
          %v773 = vpack.c.b16 %v763, %v762
          %v774 = vpack.c.b16 %v765, %v764
          %v775 = vpack.c.b16 %v767, %v766
          %v780 = vunpack.c.l.b16 %v728
          %v781 = vunpack.c.l.b16 %v729
          %v782 = vunpack.c.l.b16 %v730
          %v783 = vunpack.c.l.b16 %v731
          %v784 = vpack.c.b16 %v781, %v780
          %v785 = vpack.c.b16 %v783, %v782
          %v789 = vsel %vm621, %v768, 0
          %v792 = vsel %vm621, %v769, 0
          %v795 = vsel %vm621, %v770, 0
          %v798 = vsel %vm621, %v771, 0
          %v801 = vsel %vm621, %v772, 0
          %v804 = vsel %vm621, %v773, 0
          %v807 = vsel %vm621, %v774, 0
          %v810 = vsel %vm621, %v775, 0
          %812 = vmatpush.bf16.msra.mxu0 0
          %813 = vmatpush.bf16.msra.mxu0 0
          %814 = vmatpush.bf16.msra.mxu0 0
          %815 = vmatpush.bf16.msra.mxu0 0
          %816 = vmatpush.bf16.msra.mxu0 0
          %817 = vmatpush.bf16.msra.mxu0 0
          %818 = vmatpush.bf16.msra.mxu0 %v785
          %819 = vmatpush.bf16.msra.mxu0 %v784
          %820 = vmatmul.bf16.gmra.mxu0 %v789
          %v821 = vpop.f32.mrf.mxu0
          %v822 = vadd.f32 %v734, %v821
          %v823 = vpop.f32.mrf.mxu0
          %v824 = vadd.f32 %v734, %v823
          %825 = vmatmul.bf16.gmra.mxu0 %v792
          %v826 = vpop.f32.mrf.mxu0
          %v827 = vadd.f32 %v734, %v826
          %v828 = vpop.f32.mrf.mxu0
          %v829 = vadd.f32 %v734, %v828
          %830 = vmatmul.bf16.gmra.mxu0 %v795
          %v831 = vpop.f32.mrf.mxu0
          %v832 = vadd.f32 %v734, %v831
          %v833 = vpop.f32.mrf.mxu0
          %v834 = vadd.f32 %v734, %v833
          %835 = vmatmul.bf16.gmra.mxu0 %v798
          %v836 = vpop.f32.mrf.mxu0
          %v837 = vadd.f32 %v734, %v836
          %v838 = vpop.f32.mrf.mxu0
          %v839 = vadd.f32 %v734, %v838
          %840 = vmatmul.bf16.gmra.mxu0 %v801
          %v841 = vpop.f32.mrf.mxu0
          %v842 = vadd.f32 %v734, %v841
          %v843 = vpop.f32.mrf.mxu0
          %v844 = vadd.f32 %v734, %v843
          %845 = vmatmul.bf16.gmra.mxu0 %v804
          %v846 = vpop.f32.mrf.mxu0
          %v847 = vadd.f32 %v734, %v846
          %v848 = vpop.f32.mrf.mxu0
          %v849 = vadd.f32 %v734, %v848
          %850 = vmatmul.bf16.gmra.mxu0 %v807
          %v851 = vpop.f32.mrf.mxu0
          %v852 = vadd.f32 %v734, %v851
          %v853 = vpop.f32.mrf.mxu0
          %v854 = vadd.f32 %v734, %v853
          %855 = vmatmul.bf16.gmra.mxu0 %v810
          %v856 = vpop.f32.mrf.mxu0
          %v857 = vadd.f32 %v734, %v856
          %v858 = vpop.f32.mrf.mxu0
          %v859 = vadd.f32 %v734, %v858
          %860 = vdwg.mxu0
          %v861 = vpack.c.bf16 %v822, %v822
          %v862 = vpack.c.bf16 %v824, %v824
          %v863 = vpack.c.bf16 %v827, %v827
          %v864 = vpack.c.bf16 %v829, %v829
          %v865 = vpack.c.bf16 %v832, %v832
          %v866 = vpack.c.bf16 %v834, %v834
          %v867 = vpack.c.bf16 %v837, %v837
          %v868 = vpack.c.bf16 %v839, %v839
          %v869 = vpack.c.bf16 %v842, %v842
          %v870 = vpack.c.bf16 %v844, %v844
          %v871 = vpack.c.bf16 %v847, %v847
          %v872 = vpack.c.bf16 %v849, %v849
          %v873 = vpack.c.bf16 %v852, %v852
          %v874 = vpack.c.bf16 %v854, %v854
          %v875 = vpack.c.bf16 %v857, %v857
          %v876 = vpack.c.bf16 %v859, %v859
          %877 = vst.msk [vmem:[#allocation3] sm:$0xf] %vm711, %v861
          %878 = vst.msk [vmem:[#allocation3 + $0x4] sm:$0xf] %vm711, %v862
          %879 = vst.msk [vmem:[#allocation3 + $0x8] sm:$0xf] %vm711, %v863
          %880 = vst.msk [vmem:[#allocation3 + $0xc] sm:$0xf] %vm711, %v864
          %881 = vst.msk [vmem:[#allocation3 + $0x10] sm:$0xf] %vm711, %v865
          %882 = vst.msk [vmem:[#allocation3 + $0x14] sm:$0xf] %vm711, %v866
          %883 = vst.msk [vmem:[#allocation3 + $0x18] sm:$0xf] %vm711, %v867
          %884 = vst.msk [vmem:[#allocation3 + $0x1c] sm:$0xf] %vm711, %v868
          %885 = vst.msk [vmem:[#allocation3 + $0x20] sm:$0xf] %vm711, %v869
          %886 = vst.msk [vmem:[#allocation3 + $0x24] sm:$0xf] %vm711, %v870
          %887 = vst.msk [vmem:[#allocation3 + $0x28] sm:$0xf] %vm711, %v871
          %888 = vst.msk [vmem:[#allocation3 + $0x2c] sm:$0xf] %vm711, %v872
          %889 = vst.msk [vmem:[#allocation3 + $0x30] sm:$0xf] %vm711, %v873
          %890 = vst.msk [vmem:[#allocation3 + $0x34] sm:$0xf] %vm711, %v874
          %891 = vst.msk [vmem:[#allocation3 + $0x38] sm:$0xf] %vm711, %v875
          %892 = vst.msk [vmem:[#allocation3 + $0x3c] sm:$0xf] %vm711, %v876
        $region72: #{tpu_custom_call.1} parent=67 // pred_fallthru
          _
        %v893 = vld [vmem:[%s510] sm:$0xf]
        %v894 = vld [vmem:[%s510 + $0x4] sm:$0xf]
        %v895 = vld [vmem:[%s3] sm:$0xf]
        %v896 = vld [vmem:[%s3 + $0x4] sm:$0xf]
        %v897 = vld [vmem:[%s3 + $0x8] sm:$0xf]
        %v898 = vld [vmem:[%s3 + $0xc] sm:$0xf]
        %v899 = vld [vmem:[%s4] sm:$0x1]
        %v901 = vperm.slane %v899, 0
        %v905 = vunpack.c.l.b16 %v893
        %v906 = vunpack.c.l.b16 %v894
        %v907 = vpack.c.b16 %v906, %v905
        %v912 = vunpack.c.l.b16 %v895
        %v913 = vunpack.c.l.b16 %v896
        %v914 = vunpack.c.l.b16 %v897
        %v915 = vunpack.c.l.b16 %v898
        %v916 = vpack.c.b16 %v913, %v912
        %v917 = vpack.c.b16 %v915, %v914
        %vm920 = vcmask 261120
        %v922 = vsel %vm920, %v907, 0
        %924 = vmatpush.bf16.msra.mxu0 0
        %925 = vmatpush.bf16.msra.mxu0 0
        %926 = vmatpush.bf16.msra.mxu0 0
        %927 = vmatpush.bf16.msra.mxu0 0
        %928 = vmatpush.bf16.msra.mxu0 0
        %929 = vmatpush.bf16.msra.mxu0 0
        %930 = vmatpush.bf16.msra.mxu0 %v917
        %931 = vmatpush.bf16.msra.mxu0 %v916
        %932 = vmatmul.bf16.gmra.mxu0 %v922
        %v933 = vpop.f32.mrf.mxu0
        %v934 = vadd.f32 %v901, %v933
        %v935 = vpop.f32.mrf.mxu0
        %v936 = vadd.f32 %v901, %v935
        %937 = vdwg.mxu0
        %v938 = vpack.c.bf16 %v934, %v934
        %v939 = vpack.c.bf16 %v936, %v936
        %v940 = vld [vmem:[%s11] sm:$0x1]
        %v941 = vld [vmem:[#allocation2] sm:$0xf]
        %v942 = vld [vmem:[#allocation2 + $0x4] sm:$0xf]
        %v943 = vld [vmem:[#allocation2 + $0x8] sm:$0xf]
        %v944 = vld [vmem:[#allocation2 + $0xc] sm:$0xf]
        %v945 = vld [vmem:[#allocation2 + $0x10] sm:$0xf]
        %v946 = vld [vmem:[#allocation2 + $0x14] sm:$0xf]
        %v947 = vld [vmem:[#allocation2 + $0x18] sm:$0xf]
        %v948 = vld [vmem:[#allocation2 + $0x1c] sm:$0xf]
        %v949 = vld [vmem:[#allocation2 + $0x20] sm:$0xf]
        %v950 = vld [vmem:[#allocation2 + $0x24] sm:$0xf]
        %v951 = vld [vmem:[#allocation2 + $0x28] sm:$0xf]
        %v952 = vld [vmem:[#allocation2 + $0x2c] sm:$0xf]
        %v953 = vld [vmem:[#allocation2 + $0x30] sm:$0xf]
        %v954 = vld [vmem:[#allocation2 + $0x34] sm:$0xf]
        %v955 = vld [vmem:[#allocation2 + $0x38] sm:$0xf]
        %v956 = vld [vmem:[#allocation2 + $0x3c] sm:$0xf]
        %v957 = vld [vmem:[#allocation3] sm:$0xf]
        %v958 = vld [vmem:[#allocation3 + $0x4] sm:$0xf]
        %v959 = vld [vmem:[#allocation3 + $0x8] sm:$0xf]
        %v960 = vld [vmem:[#allocation3 + $0xc] sm:$0xf]
        %v961 = vld [vmem:[#allocation3 + $0x10] sm:$0xf]
        %v962 = vld [vmem:[#allocation3 + $0x14] sm:$0xf]
        %v963 = vld [vmem:[#allocation3 + $0x18] sm:$0xf]
        %v964 = vld [vmem:[#allocation3 + $0x1c] sm:$0xf]
        %v965 = vld [vmem:[#allocation3 + $0x20] sm:$0xf]
        %v966 = vld [vmem:[#allocation3 + $0x24] sm:$0xf]
        %v967 = vld [vmem:[#allocation3 + $0x28] sm:$0xf]
        %v968 = vld [vmem:[#allocation3 + $0x2c] sm:$0xf]
        %v969 = vld [vmem:[#allocation3 + $0x30] sm:$0xf]
        %v970 = vld [vmem:[#allocation3 + $0x34] sm:$0xf]
        %v971 = vld [vmem:[#allocation3 + $0x38] sm:$0xf]
        %v972 = vld [vmem:[#allocation3 + $0x3c] sm:$0xf]
        %v974 = vperm.slane %v940, 0
        %v978 = vunpack.c.l.b16 %v938
        %v979 = vunpack.c.l.b16 %v939
        %v980 = vpack.c.b16 %v979, %v978
        %v997 = vunpack.c.l.b16 %v941
        %v998 = vunpack.c.l.b16 %v942
        %v999 = vunpack.c.l.b16 %v943
        %v1000 = vunpack.c.l.b16 %v944
        %v1001 = vunpack.c.l.b16 %v945
        %v1002 = vunpack.c.l.b16 %v946
        %v1003 = vunpack.c.l.b16 %v947
        %v1004 = vunpack.c.l.b16 %v948
        %v1005 = vunpack.c.l.b16 %v949
        %v1006 = vunpack.c.l.b16 %v950
        %v1007 = vunpack.c.l.b16 %v951
        %v1008 = vunpack.c.l.b16 %v952
        %v1009 = vunpack.c.l.b16 %v953
        %v1010 = vunpack.c.l.b16 %v954
        %v1011 = vunpack.c.l.b16 %v955
        %v1012 = vunpack.c.l.b16 %v956
        %v1013 = vpack.c.b16 %v998, %v997
        %v1014 = vpack.c.b16 %v1000, %v999
        %v1015 = vpack.c.b16 %v1002, %v1001
        %v1016 = vpack.c.b16 %v1004, %v1003
        %v1017 = vpack.c.b16 %v1006, %v1005
        %v1018 = vpack.c.b16 %v1008, %v1007
        %v1019 = vpack.c.b16 %v1010, %v1009
        %v1020 = vpack.c.b16 %v1012, %v1011
        %vm1021 = vcmask 64512
        %v1023 = vsel %vm1021, %v980, 0
        %v1026 = vsel %vm1021, %v1013, 0
        %v1029 = vsel %vm1021, %v1014, 0
        %v1032 = vsel %vm1021, %v1015, 0
        %v1035 = vsel %vm1021, %v1016, 0
        %v1038 = vsel %vm1021, %v1017, 0
        %v1041 = vsel %vm1021, %v1018, 0
        %v1044 = vsel %vm1021, %v1019, 0
        %v1047 = vsel %vm1021, %v1020, 0
        %1049 = vmatpush.bf16.xpose.msra.mxu0 %v1047
        %1050 = vmatpush.bf16.xpose.msra.mxu0 %v1044
        %1051 = vmatpush.bf16.xpose.msra.mxu0 %v1041
        %1052 = vmatpush.bf16.xpose.msra.mxu0 %v1038
        %1053 = vmatpush.bf16.xpose.msra.mxu0 %v1035
        %1054 = vmatpush.bf16.xpose.msra.mxu0 %v1032
        %1055 = vmatpush.bf16.xpose.msra.mxu0 %v1029
        %1056 = vmatpush.bf16.xpose.msra.mxu0 %v1026
        %1057 = vmatmul.bf16.gmra.mxu0 %v1023
        %v1058 = vpop.f32.mrf.mxu0
        %v1059 = vadd.f32 %v974, %v1058
        %v1060 = vpop.f32.mrf.mxu0
        %v1061 = vadd.f32 %v974, %v1060
        %1062 = vdwg.mxu0
        %1063 = vmax.xlane.f32.xlu0 %v1059
        %v1064 = vpop.xlane.xlu0 %1063
        %1065 = vmax.xlane.f32.xlu0 %v1061
        %v1066 = vpop.xlane.xlu0 %1065
        %v1067 = vsub.f32 %v1059, %v1064
        %v1068 = vsub.f32 %v1061, %v1066
        %v1069 = vmul.f32 %v1067, 1.442695
        %v1070 = vpow.pop %v1069
        %v1071 = vmul.f32 %v1068, 1.442695
        %v1072 = vpow.pop %v1071
        %1073 = vadd.xlane.f32.xlu0 %v1070
        %v1074 = vpop.xlane.xlu0 %1073
        %1075 = vadd.xlane.f32.xlu0 %v1072
        %v1076 = vpop.xlane.xlu0 %1075
        %v1077 = vrcp.pop %v1074
        %v1078 = vrcp.pop %v1076
        %v1079 = vmul.f32 %v1070, %v1077
        %v1080 = vmul.f32 %v1072, %v1078
        %v1081 = vpack.c.bf16 %v1079, %v1079
        %v1082 = vpack.c.bf16 %v1080, %v1080
        %1083 = vst [vmem:[%s501] sm:$0xf] %v1081
        %1084 = vst [vmem:[%s501 + $0x4] sm:$0xf] %v1082
        %v1087 = vunpack.c.l.b16 %v1081
        %v1088 = vunpack.c.l.b16 %v1082
        %v1089 = vpack.c.b16 %v1088, %v1087
        %v1107 = vunpack.c.l.b16 %v957
        %v1108 = vunpack.c.l.b16 %v958
        %v1109 = vunpack.c.l.b16 %v959
        %v1110 = vunpack.c.l.b16 %v960
        %v1111 = vunpack.c.l.b16 %v961
        %v1112 = vunpack.c.l.b16 %v962
        %v1113 = vunpack.c.l.b16 %v963
        %v1114 = vunpack.c.l.b16 %v964
        %v1115 = vunpack.c.l.b16 %v965
        %v1116 = vunpack.c.l.b16 %v966
        %v1117 = vunpack.c.l.b16 %v967
        %v1118 = vunpack.c.l.b16 %v968
        %v1119 = vunpack.c.l.b16 %v969
        %v1120 = vunpack.c.l.b16 %v970
        %v1121 = vunpack.c.l.b16 %v971
        %v1122 = vunpack.c.l.b16 %v972
        %v1123 = vpack.c.b16 %v1108, %v1107
        %v1124 = vpack.c.b16 %v1110, %v1109
        %v1125 = vpack.c.b16 %v1112, %v1111
        %v1126 = vpack.c.b16 %v1114, %v1113
        %v1127 = vpack.c.b16 %v1116, %v1115
        %v1128 = vpack.c.b16 %v1118, %v1117
        %v1129 = vpack.c.b16 %v1120, %v1119
        %v1130 = vpack.c.b16 %v1122, %v1121
        %1139 = vmatpush.bf16.msra.mxu0 %v1130
        %1140 = vmatpush.bf16.msra.mxu0 %v1129
        %1141 = vmatpush.bf16.msra.mxu0 %v1128
        %1142 = vmatpush.bf16.msra.mxu0 %v1127
        %1143 = vmatpush.bf16.msra.mxu0 %v1126
        %1144 = vmatpush.bf16.msra.mxu0 %v1125
        %1145 = vmatpush.bf16.msra.mxu0 %v1124
        %1146 = vmatpush.bf16.msra.mxu0 %v1123
        %1147 = vmatmul.bf16.gmra.mxu0 %v1089
        %v1148 = vpop.f32.mrf.mxu0
        %v1149 = vadd.f32 0.0, %v1148
        %v1150 = vpop.f32.mrf.mxu0
        %v1151 = vadd.f32 0.0, %v1150
        %1152 = vdwg.mxu0
        %v1153 = vpack.c.bf16 %v1149, %v1149
        %v1154 = vpack.c.bf16 %v1151, %v1151
        %v1155 = vld [vmem:[#allocation2] sm:$0xf]
        %v1156 = vld [vmem:[#allocation2 + $0x4] sm:$0xf]
        %v1157 = vld [vmem:[#allocation2 + $0x8] sm:$0xf]
        %v1158 = vld [vmem:[#allocation2 + $0xc] sm:$0xf]
        %v1159 = vld [vmem:[#allocation2 + $0x10] sm:$0xf]
        %v1160 = vld [vmem:[#allocation2 + $0x14] sm:$0xf]
        %v1161 = vld [vmem:[#allocation2 + $0x18] sm:$0xf]
        %v1162 = vld [vmem:[#allocation2 + $0x1c] sm:$0xf]
        %v1163 = vld [vmem:[#allocation2 + $0x20] sm:$0xf]
        %v1164 = vld [vmem:[#allocation2 + $0x24] sm:$0xf]
        %v1165 = vld [vmem:[#allocation2 + $0x28] sm:$0xf]
        %v1166 = vld [vmem:[#allocation2 + $0x2c] sm:$0xf]
        %v1167 = vld [vmem:[#allocation2 + $0x30] sm:$0xf]
        %v1168 = vld [vmem:[#allocation2 + $0x34] sm:$0xf]
        %v1169 = vld [vmem:[#allocation2 + $0x38] sm:$0xf]
        %v1170 = vld [vmem:[#allocation2 + $0x3c] sm:$0xf]
        %v1171 = vld [vmem:[#allocation3] sm:$0xf]
        %v1172 = vld [vmem:[#allocation3 + $0x4] sm:$0xf]
        %v1173 = vld [vmem:[#allocation3 + $0x8] sm:$0xf]
        %v1174 = vld [vmem:[#allocation3 + $0xc] sm:$0xf]
        %v1175 = vld [vmem:[#allocation3 + $0x10] sm:$0xf]
        %v1176 = vld [vmem:[#allocation3 + $0x14] sm:$0xf]
        %v1177 = vld [vmem:[#allocation3 + $0x18] sm:$0xf]
        %v1178 = vld [vmem:[#allocation3 + $0x1c] sm:$0xf]
        %v1179 = vld [vmem:[#allocation3 + $0x20] sm:$0xf]
        %v1180 = vld [vmem:[#allocation3 + $0x24] sm:$0xf]
        %v1181 = vld [vmem:[#allocation3 + $0x28] sm:$0xf]
        %v1182 = vld [vmem:[#allocation3 + $0x2c] sm:$0xf]
        %v1183 = vld [vmem:[#allocation3 + $0x30] sm:$0xf]
        %v1184 = vld [vmem:[#allocation3 + $0x34] sm:$0xf]
        %v1185 = vld [vmem:[#allocation3 + $0x38] sm:$0xf]
        %v1186 = vld [vmem:[#allocation3 + $0x3c] sm:$0xf]
        %1187 = vrot.lane.b32.xlu0 %v980, 120
        %v1188 = vpop.permute.xlu0 %1187
        %v1205 = vunpack.c.l.b16 %v1155
        %v1206 = vunpack.c.l.b16 %v1156
        %v1207 = vunpack.c.l.b16 %v1157
        %v1208 = vunpack.c.l.b16 %v1158
        %v1209 = vunpack.c.l.b16 %v1159
        %v1210 = vunpack.c.l.b16 %v1160
        %v1211 = vunpack.c.l.b16 %v1161
        %v1212 = vunpack.c.l.b16 %v1162
        %v1213 = vunpack.c.l.b16 %v1163
        %v1214 = vunpack.c.l.b16 %v1164
        %v1215 = vunpack.c.l.b16 %v1165
        %v1216 = vunpack.c.l.b16 %v1166
        %v1217 = vunpack.c.l.b16 %v1167
        %v1218 = vunpack.c.l.b16 %v1168
        %v1219 = vunpack.c.l.b16 %v1169
        %v1220 = vunpack.c.l.b16 %v1170
        %v1221 = vpack.c.b16 %v1206, %v1205
        %v1222 = vpack.c.b16 %v1208, %v1207
        %v1223 = vpack.c.b16 %v1210, %v1209
        %v1224 = vpack.c.b16 %v1212, %v1211
        %v1225 = vpack.c.b16 %v1214, %v1213
        %v1226 = vpack.c.b16 %v1216, %v1215
        %v1227 = vpack.c.b16 %v1218, %v1217
        %v1228 = vpack.c.b16 %v1220, %v1219
        %1229 = vrot.lane.b32.xlu0 %v1221, 120
        %v1230 = vpop.permute.xlu0 %1229
        %1231 = vrot.lane.b32.xlu0 %v1222, 120
        %v1232 = vpop.permute.xlu0 %1231
        %1233 = vrot.lane.b32.xlu0 %v1223, 120
        %v1234 = vpop.permute.xlu0 %1233
        %1235 = vrot.lane.b32.xlu0 %v1224, 120
        %v1236 = vpop.permute.xlu0 %1235
        %1237 = vrot.lane.b32.xlu0 %v1225, 120
        %v1238 = vpop.permute.xlu0 %1237
        %1239 = vrot.lane.b32.xlu0 %v1226, 120
        %v1240 = vpop.permute.xlu0 %1239
        %1241 = vrot.lane.b32.xlu0 %v1227, 120
        %v1242 = vpop.permute.xlu0 %1241
        %1243 = vrot.lane.b32.xlu0 %v1228, 120
        %v1244 = vpop.permute.xlu0 %1243
        %v1246 = vsel %vm1021, %v1188, 0
        %v1249 = vsel %vm1021, %v1230, 0
        %v1252 = vsel %vm1021, %v1232, 0
        %v1255 = vsel %vm1021, %v1234, 0
        %v1258 = vsel %vm1021, %v1236, 0
        %v1261 = vsel %vm1021, %v1238, 0
        %v1264 = vsel %vm1021, %v1240, 0
        %v1267 = vsel %vm1021, %v1242, 0
        %v1270 = vsel %vm1021, %v1244, 0
        %1272 = vmatpush.bf16.xpose.msra.mxu0 %v1270
        %1273 = vmatpush.bf16.xpose.msra.mxu0 %v1267
        %1274 = vmatpush.bf16.xpose.msra.mxu0 %v1264
        %1275 = vmatpush.bf16.xpose.msra.mxu0 %v1261
        %1276 = vmatpush.bf16.xpose.msra.mxu0 %v1258
        %1277 = vmatpush.bf16.xpose.msra.mxu0 %v1255
        %1278 = vmatpush.bf16.xpose.msra.mxu0 %v1252
        %1279 = vmatpush.bf16.xpose.msra.mxu0 %v1249
        %1280 = vmatmul.bf16.gmra.mxu0 %v1246
        %v1281 = vpop.f32.mrf.mxu0
        %v1282 = vadd.f32 %v974, %v1281
        %v1283 = vpop.f32.mrf.mxu0
        %v1284 = vadd.f32 %v974, %v1283
        %1285 = vdwg.mxu0
        %1286 = vmax.xlane.f32.xlu0 %v1282
        %v1287 = vpop.xlane.xlu0 %1286
        %1288 = vmax.xlane.f32.xlu0 %v1284
        %v1289 = vpop.xlane.xlu0 %1288
        %v1290 = vsub.f32 %v1282, %v1287
        %v1291 = vsub.f32 %v1284, %v1289
        %v1292 = vmul.f32 %v1290, 1.442695
        %v1293 = vpow.pop %v1292
        %v1294 = vmul.f32 %v1291, 1.442695
        %v1295 = vpow.pop %v1294
        %1296 = vadd.xlane.f32.xlu0 %v1293
        %v1297 = vpop.xlane.xlu0 %1296
        %1298 = vadd.xlane.f32.xlu0 %v1295
        %v1299 = vpop.xlane.xlu0 %1298
        %v1300 = vrcp.pop %v1297
        %v1301 = vrcp.pop %v1299
        %v1302 = vmul.f32 %v1293, %v1300
        %v1303 = vmul.f32 %v1295, %v1301
        %v1304 = vpack.c.bf16 %v1302, %v1302
        %v1305 = vpack.c.bf16 %v1303, %v1303
        %s1306 = scalar_lea.vmem %s501, 8 [#allocation6]
        %1307 = vst [vmem:[%s1306] sm:$0xf] %v1304
        %1308 = vst [vmem:[%s1306 + $0x4] sm:$0xf] %v1305
        %v1311 = vunpack.c.l.b16 %v1304
        %v1312 = vunpack.c.l.b16 %v1305
        %v1313 = vpack.c.b16 %v1312, %v1311
        %v1331 = vunpack.c.l.b16 %v1171
        %v1332 = vunpack.c.l.b16 %v1172
        %v1333 = vunpack.c.l.b16 %v1173
        %v1334 = vunpack.c.l.b16 %v1174
        %v1335 = vunpack.c.l.b16 %v1175
        %v1336 = vunpack.c.l.b16 %v1176
        %v1337 = vunpack.c.l.b16 %v1177
        %v1338 = vunpack.c.l.b16 %v1178
        %v1339 = vunpack.c.l.b16 %v1179
        %v1340 = vunpack.c.l.b16 %v1180
        %v1341 = vunpack.c.l.b16 %v1181
        %v1342 = vunpack.c.l.b16 %v1182
        %v1343 = vunpack.c.l.b16 %v1183
        %v1344 = vunpack.c.l.b16 %v1184
        %v1345 = vunpack.c.l.b16 %v1185
        %v1346 = vunpack.c.l.b16 %v1186
        %v1347 = vpack.c.b16 %v1332, %v1331
        %v1348 = vpack.c.b16 %v1334, %v1333
        %v1349 = vpack.c.b16 %v1336, %v1335
        %v1350 = vpack.c.b16 %v1338, %v1337
        %v1351 = vpack.c.b16 %v1340, %v1339
        %v1352 = vpack.c.b16 %v1342, %v1341
        %v1353 = vpack.c.b16 %v1344, %v1343
        %v1354 = vpack.c.b16 %v1346, %v1345
        %1355 = vrot.lane.b32.xlu0 %v1347, 120
        %v1356 = vpop.permute.xlu0 %1355
        %1357 = vrot.lane.b32.xlu0 %v1348, 120
        %v1358 = vpop.permute.xlu0 %1357
        %1359 = vrot.lane.b32.xlu0 %v1349, 120
        %v1360 = vpop.permute.xlu0 %1359
        %1361 = vrot.lane.b32.xlu0 %v1350, 120
        %v1362 = vpop.permute.xlu0 %1361
        %1363 = vrot.lane.b32.xlu0 %v1351, 120
        %v1364 = vpop.permute.xlu0 %1363
        %1365 = vrot.lane.b32.xlu0 %v1352, 120
        %v1366 = vpop.permute.xlu0 %1365
        %1367 = vrot.lane.b32.xlu0 %v1353, 120
        %v1368 = vpop.permute.xlu0 %1367
        %1369 = vrot.lane.b32.xlu0 %v1354, 120
        %v1370 = vpop.permute.xlu0 %1369
        %1379 = vmatpush.bf16.msra.mxu0 %v1370
        %1380 = vmatpush.bf16.msra.mxu0 %v1368
        %1381 = vmatpush.bf16.msra.mxu0 %v1366
        %1382 = vmatpush.bf16.msra.mxu0 %v1364
        %1383 = vmatpush.bf16.msra.mxu0 %v1362
        %1384 = vmatpush.bf16.msra.mxu0 %v1360
        %1385 = vmatpush.bf16.msra.mxu0 %v1358
        %1386 = vmatpush.bf16.msra.mxu0 %v1356
        %1387 = vmatmul.bf16.gmra.mxu0 %v1313
        %v1388 = vpop.f32.mrf.mxu0
        %v1389 = vadd.f32 0.0, %v1388
        %v1390 = vpop.f32.mrf.mxu0
        %v1391 = vadd.f32 0.0, %v1390
        %1392 = vdwg.mxu0
        %v1393 = vpack.c.bf16 %v1389, %v1389
        %v1394 = vpack.c.bf16 %v1391, %v1391
        %v1395 = vld [vmem:[#allocation2] sm:$0xf]
        %v1396 = vld [vmem:[#allocation2 + $0x4] sm:$0xf]
        %v1397 = vld [vmem:[#allocation2 + $0x8] sm:$0xf]
        %v1398 = vld [vmem:[#allocation2 + $0xc] sm:$0xf]
        %v1399 = vld [vmem:[#allocation2 + $0x10] sm:$0xf]
        %v1400 = vld [vmem:[#allocation2 + $0x14] sm:$0xf]
        %v1401 = vld [vmem:[#allocation2 + $0x18] sm:$0xf]
        %v1402 = vld [vmem:[#allocation2 + $0x1c] sm:$0xf]
        %v1403 = vld [vmem:[#allocation2 + $0x20] sm:$0xf]
        %v1404 = vld [vmem:[#allocation2 + $0x24] sm:$0xf]
        %v1405 = vld [vmem:[#allocation2 + $0x28] sm:$0xf]
        %v1406 = vld [vmem:[#allocation2 + $0x2c] sm:$0xf]
        %v1407 = vld [vmem:[#allocation2 + $0x30] sm:$0xf]
        %v1408 = vld [vmem:[#allocation2 + $0x34] sm:$0xf]
        %v1409 = vld [vmem:[#allocation2 + $0x38] sm:$0xf]
        %v1410 = vld [vmem:[#allocation2 + $0x3c] sm:$0xf]
        %v1411 = vld [vmem:[#allocation3] sm:$0xf]
        %v1412 = vld [vmem:[#allocation3 + $0x4] sm:$0xf]
        %v1413 = vld [vmem:[#allocation3 + $0x8] sm:$0xf]
        %v1414 = vld [vmem:[#allocation3 + $0xc] sm:$0xf]
        %v1415 = vld [vmem:[#allocation3 + $0x10] sm:$0xf]
        %v1416 = vld [vmem:[#allocation3 + $0x14] sm:$0xf]
        %v1417 = vld [vmem:[#allocation3 + $0x18] sm:$0xf]
        %v1418 = vld [vmem:[#allocation3 + $0x1c] sm:$0xf]
        %v1419 = vld [vmem:[#allocation3 + $0x20] sm:$0xf]
        %v1420 = vld [vmem:[#allocation3 + $0x24] sm:$0xf]
        %v1421 = vld [vmem:[#allocation3 + $0x28] sm:$0xf]
        %v1422 = vld [vmem:[#allocation3 + $0x2c] sm:$0xf]
        %v1423 = vld [vmem:[#allocation3 + $0x30] sm:$0xf]
        %v1424 = vld [vmem:[#allocation3 + $0x34] sm:$0xf]
        %v1425 = vld [vmem:[#allocation3 + $0x38] sm:$0xf]
        %v1426 = vld [vmem:[#allocation3 + $0x3c] sm:$0xf]
        %1427 = vrot.lane.b32.xlu0 %v980, 112
        %v1428 = vpop.permute.xlu0 %1427
        %v1445 = vunpack.c.l.b16 %v1395
        %v1446 = vunpack.c.l.b16 %v1396
        %v1447 = vunpack.c.l.b16 %v1397
        %v1448 = vunpack.c.l.b16 %v1398
        %v1449 = vunpack.c.l.b16 %v1399
        %v1450 = vunpack.c.l.b16 %v1400
        %v1451 = vunpack.c.l.b16 %v1401
        %v1452 = vunpack.c.l.b16 %v1402
        %v1453 = vunpack.c.l.b16 %v1403
        %v1454 = vunpack.c.l.b16 %v1404
        %v1455 = vunpack.c.l.b16 %v1405
        %v1456 = vunpack.c.l.b16 %v1406
        %v1457 = vunpack.c.l.b16 %v1407
        %v1458 = vunpack.c.l.b16 %v1408
        %v1459 = vunpack.c.l.b16 %v1409
        %v1460 = vunpack.c.l.b16 %v1410
        %v1461 = vpack.c.b16 %v1446, %v1445
        %v1462 = vpack.c.b16 %v1448, %v1447
        %v1463 = vpack.c.b16 %v1450, %v1449
        %v1464 = vpack.c.b16 %v1452, %v1451
        %v1465 = vpack.c.b16 %v1454, %v1453
        %v1466 = vpack.c.b16 %v1456, %v1455
        %v1467 = vpack.c.b16 %v1458, %v1457
        %v1468 = vpack.c.b16 %v1460, %v1459
        %1469 = vrot.lane.b32.xlu0 %v1461, 112
        %v1470 = vpop.permute.xlu0 %1469
        %1471 = vrot.lane.b32.xlu0 %v1462, 112
        %v1472 = vpop.permute.xlu0 %1471
        %1473 = vrot.lane.b32.xlu0 %v1463, 112
        %v1474 = vpop.permute.xlu0 %1473
        %1475 = vrot.lane.b32.xlu0 %v1464, 112
        %v1476 = vpop.permute.xlu0 %1475
        %1477 = vrot.lane.b32.xlu0 %v1465, 112
        %v1478 = vpop.permute.xlu0 %1477
        %1479 = vrot.lane.b32.xlu0 %v1466, 112
        %v1480 = vpop.permute.xlu0 %1479
        %1481 = vrot.lane.b32.xlu0 %v1467, 112
        %v1482 = vpop.permute.xlu0 %1481
        %1483 = vrot.lane.b32.xlu0 %v1468, 112
        %v1484 = vpop.permute.xlu0 %1483
        %v1486 = vsel %vm1021, %v1428, 0
        %v1489 = vsel %vm1021, %v1470, 0
        %v1492 = vsel %vm1021, %v1472, 0
        %v1495 = vsel %vm1021, %v1474, 0
        %v1498 = vsel %vm1021, %v1476, 0
        %v1501 = vsel %vm1021, %v1478, 0
        %v1504 = vsel %vm1021, %v1480, 0
        %v1507 = vsel %vm1021, %v1482, 0
        %v1510 = vsel %vm1021, %v1484, 0
        %1512 = vmatpush.bf16.xpose.msra.mxu0 %v1510
        %1513 = vmatpush.bf16.xpose.msra.mxu0 %v1507
        %1514 = vmatpush.bf16.xpose.msra.mxu0 %v1504
        %1515 = vmatpush.bf16.xpose.msra.mxu0 %v1501
        %1516 = vmatpush.bf16.xpose.msra.mxu0 %v1498
        %1517 = vmatpush.bf16.xpose.msra.mxu0 %v1495
        %1518 = vmatpush.bf16.xpose.msra.mxu0 %v1492
        %1519 = vmatpush.bf16.xpose.msra.mxu0 %v1489
        %1520 = vmatmul.bf16.gmra.mxu0 %v1486
        %v1521 = vpop.f32.mrf.mxu0
        %v1522 = vadd.f32 %v974, %v1521
        %v1523 = vpop.f32.mrf.mxu0
        %v1524 = vadd.f32 %v974, %v1523
        %1525 = vdwg.mxu0
        %1526 = vmax.xlane.f32.xlu0 %v1522
        %v1527 = vpop.xlane.xlu0 %1526
        %1528 = vmax.xlane.f32.xlu0 %v1524
        %v1529 = vpop.xlane.xlu0 %1528
        %v1530 = vsub.f32 %v1522, %v1527
        %v1531 = vsub.f32 %v1524, %v1529
        %v1532 = vmul.f32 %v1530, 1.442695
        %v1533 = vpow.pop %v1532
        %v1534 = vmul.f32 %v1531, 1.442695
        %v1535 = vpow.pop %v1534
        %1536 = vadd.xlane.f32.xlu0 %v1533
        %v1537 = vpop.xlane.xlu0 %1536
        %1538 = vadd.xlane.f32.xlu0 %v1535
        %v1539 = vpop.xlane.xlu0 %1538
        %v1540 = vrcp.pop %v1537
        %v1541 = vrcp.pop %v1539
        %v1542 = vmul.f32 %v1533, %v1540
        %v1543 = vmul.f32 %v1535, %v1541
        %v1544 = vpack.c.bf16 %v1542, %v1542
        %v1545 = vpack.c.bf16 %v1543, %v1543
        %s1546 = scalar_lea.vmem %s501, 16 [#allocation6]
        %1547 = vst [vmem:[%s1546] sm:$0xf] %v1544
        %1548 = vst [vmem:[%s1546 + $0x4] sm:$0xf] %v1545
        %v1551 = vunpack.c.l.b16 %v1544
        %v1552 = vunpack.c.l.b16 %v1545
        %v1553 = vpack.c.b16 %v1552, %v1551
        %v1571 = vunpack.c.l.b16 %v1411
        %v1572 = vunpack.c.l.b16 %v1412
        %v1573 = vunpack.c.l.b16 %v1413
        %v1574 = vunpack.c.l.b16 %v1414
        %v1575 = vunpack.c.l.b16 %v1415
        %v1576 = vunpack.c.l.b16 %v1416
        %v1577 = vunpack.c.l.b16 %v1417
        %v1578 = vunpack.c.l.b16 %v1418
        %v1579 = vunpack.c.l.b16 %v1419
        %v1580 = vunpack.c.l.b16 %v1420
        %v1581 = vunpack.c.l.b16 %v1421
        %v1582 = vunpack.c.l.b16 %v1422
        %v1583 = vunpack.c.l.b16 %v1423
        %v1584 = vunpack.c.l.b16 %v1424
        %v1585 = vunpack.c.l.b16 %v1425
        %v1586 = vunpack.c.l.b16 %v1426
        %v1587 = vpack.c.b16 %v1572, %v1571
        %v1588 = vpack.c.b16 %v1574, %v1573
        %v1589 = vpack.c.b16 %v1576, %v1575
        %v1590 = vpack.c.b16 %v1578, %v1577
        %v1591 = vpack.c.b16 %v1580, %v1579
        %v1592 = vpack.c.b16 %v1582, %v1581
        %v1593 = vpack.c.b16 %v1584, %v1583
        %v1594 = vpack.c.b16 %v1586, %v1585
        %1595 = vrot.lane.b32.xlu0 %v1587, 112
        %v1596 = vpop.permute.xlu0 %1595
        %1597 = vrot.lane.b32.xlu0 %v1588, 112
        %v1598 = vpop.permute.xlu0 %1597
        %1599 = vrot.lane.b32.xlu0 %v1589, 112
        %v1600 = vpop.permute.xlu0 %1599
        %1601 = vrot.lane.b32.xlu0 %v1590, 112
        %v1602 = vpop.permute.xlu0 %1601
        %1603 = vrot.lane.b32.xlu0 %v1591, 112
        %v1604 = vpop.permute.xlu0 %1603
        %1605 = vrot.lane.b32.xlu0 %v1592, 112
        %v1606 = vpop.permute.xlu0 %1605
        %1607 = vrot.lane.b32.xlu0 %v1593, 112
        %v1608 = vpop.permute.xlu0 %1607
        %1609 = vrot.lane.b32.xlu0 %v1594, 112
        %v1610 = vpop.permute.xlu0 %1609
        %1619 = vmatpush.bf16.msra.mxu0 %v1610
        %1620 = vmatpush.bf16.msra.mxu0 %v1608
        %1621 = vmatpush.bf16.msra.mxu0 %v1606
        %1622 = vmatpush.bf16.msra.mxu0 %v1604
        %1623 = vmatpush.bf16.msra.mxu0 %v1602
        %1624 = vmatpush.bf16.msra.mxu0 %v1600
        %1625 = vmatpush.bf16.msra.mxu0 %v1598
        %1626 = vmatpush.bf16.msra.mxu0 %v1596
        %1627 = vmatmul.bf16.gmra.mxu0 %v1553
        %v1628 = vpop.f32.mrf.mxu0
        %v1629 = vadd.f32 0.0, %v1628
        %v1630 = vpop.f32.mrf.mxu0
        %v1631 = vadd.f32 0.0, %v1630
        %1632 = vdwg.mxu0
        %v1633 = vpack.c.bf16 %v1629, %v1629
        %v1634 = vpack.c.bf16 %v1631, %v1631
        %v1635 = vld [vmem:[#allocation2] sm:$0xf]
        %v1636 = vld [vmem:[#allocation2 + $0x4] sm:$0xf]
        %v1637 = vld [vmem:[#allocation2 + $0x8] sm:$0xf]
        %v1638 = vld [vmem:[#allocation2 + $0xc] sm:$0xf]
        %v1639 = vld [vmem:[#allocation2 + $0x10] sm:$0xf]
        %v1640 = vld [vmem:[#allocation2 + $0x14] sm:$0xf]
        %v1641 = vld [vmem:[#allocation2 + $0x18] sm:$0xf]
        %v1642 = vld [vmem:[#allocation2 + $0x1c] sm:$0xf]
        %v1643 = vld [vmem:[#allocation2 + $0x20] sm:$0xf]
        %v1644 = vld [vmem:[#allocation2 + $0x24] sm:$0xf]
        %v1645 = vld [vmem:[#allocation2 + $0x28] sm:$0xf]
        %v1646 = vld [vmem:[#allocation2 + $0x2c] sm:$0xf]
        %v1647 = vld [vmem:[#allocation2 + $0x30] sm:$0xf]
        %v1648 = vld [vmem:[#allocation2 + $0x34] sm:$0xf]
        %v1649 = vld [vmem:[#allocation2 + $0x38] sm:$0xf]
        %v1650 = vld [vmem:[#allocation2 + $0x3c] sm:$0xf]
        %v1651 = vld [vmem:[#allocation3] sm:$0xf]
        %v1652 = vld [vmem:[#allocation3 + $0x4] sm:$0xf]
        %v1653 = vld [vmem:[#allocation3 + $0x8] sm:$0xf]
        %v1654 = vld [vmem:[#allocation3 + $0xc] sm:$0xf]
        %v1655 = vld [vmem:[#allocation3 + $0x10] sm:$0xf]
        %v1656 = vld [vmem:[#allocation3 + $0x14] sm:$0xf]
        %v1657 = vld [vmem:[#allocation3 + $0x18] sm:$0xf]
        %v1658 = vld [vmem:[#allocation3 + $0x1c] sm:$0xf]
        %v1659 = vld [vmem:[#allocation3 + $0x20] sm:$0xf]
        %v1660 = vld [vmem:[#allocation3 + $0x24] sm:$0xf]
        %v1661 = vld [vmem:[#allocation3 + $0x28] sm:$0xf]
        %v1662 = vld [vmem:[#allocation3 + $0x2c] sm:$0xf]
        %v1663 = vld [vmem:[#allocation3 + $0x30] sm:$0xf]
        %v1664 = vld [vmem:[#allocation3 + $0x34] sm:$0xf]
        %v1665 = vld [vmem:[#allocation3 + $0x38] sm:$0xf]
        %v1666 = vld [vmem:[#allocation3 + $0x3c] sm:$0xf]
        %1667 = vrot.lane.b32.xlu0 %v980, 104
        %v1668 = vpop.permute.xlu0 %1667
        %v1685 = vunpack.c.l.b16 %v1635
        %v1686 = vunpack.c.l.b16 %v1636
        %v1687 = vunpack.c.l.b16 %v1637
        %v1688 = vunpack.c.l.b16 %v1638
        %v1689 = vunpack.c.l.b16 %v1639
        %v1690 = vunpack.c.l.b16 %v1640
        %v1691 = vunpack.c.l.b16 %v1641
        %v1692 = vunpack.c.l.b16 %v1642
        %v1693 = vunpack.c.l.b16 %v1643
        %v1694 = vunpack.c.l.b16 %v1644
        %v1695 = vunpack.c.l.b16 %v1645
        %v1696 = vunpack.c.l.b16 %v1646
        %v1697 = vunpack.c.l.b16 %v1647
        %v1698 = vunpack.c.l.b16 %v1648
        %v1699 = vunpack.c.l.b16 %v1649
        %v1700 = vunpack.c.l.b16 %v1650
        %v1701 = vpack.c.b16 %v1686, %v1685
        %v1702 = vpack.c.b16 %v1688, %v1687
        %v1703 = vpack.c.b16 %v1690, %v1689
        %v1704 = vpack.c.b16 %v1692, %v1691
        %v1705 = vpack.c.b16 %v1694, %v1693
        %v1706 = vpack.c.b16 %v1696, %v1695
        %v1707 = vpack.c.b16 %v1698, %v1697
        %v1708 = vpack.c.b16 %v1700, %v1699
        %1709 = vrot.lane.b32.xlu0 %v1701, 104
        %v1710 = vpop.permute.xlu0 %1709
        %1711 = vrot.lane.b32.xlu0 %v1702, 104
        %v1712 = vpop.permute.xlu0 %1711
        %1713 = vrot.lane.b32.xlu0 %v1703, 104
        %v1714 = vpop.permute.xlu0 %1713
        %1715 = vrot.lane.b32.xlu0 %v1704, 104
        %v1716 = vpop.permute.xlu0 %1715
        %1717 = vrot.lane.b32.xlu0 %v1705, 104
        %v1718 = vpop.permute.xlu0 %1717
        %1719 = vrot.lane.b32.xlu0 %v1706, 104
        %v1720 = vpop.permute.xlu0 %1719
        %1721 = vrot.lane.b32.xlu0 %v1707, 104
        %v1722 = vpop.permute.xlu0 %1721
        %1723 = vrot.lane.b32.xlu0 %v1708, 104
        %v1724 = vpop.permute.xlu0 %1723
        %v1726 = vsel %vm1021, %v1668, 0
        %v1729 = vsel %vm1021, %v1710, 0
        %v1732 = vsel %vm1021, %v1712, 0
        %v1735 = vsel %vm1021, %v1714, 0
        %v1738 = vsel %vm1021, %v1716, 0
        %v1741 = vsel %vm1021, %v1718, 0
        %v1744 = vsel %vm1021, %v1720, 0
        %v1747 = vsel %vm1021, %v1722, 0
        %v1750 = vsel %vm1021, %v1724, 0
        %1752 = vmatpush.bf16.xpose.msra.mxu0 %v1750
        %1753 = vmatpush.bf16.xpose.msra.mxu0 %v1747
        %1754 = vmatpush.bf16.xpose.msra.mxu0 %v1744
        %1755 = vmatpush.bf16.xpose.msra.mxu0 %v1741
        %1756 = vmatpush.bf16.xpose.msra.mxu0 %v1738
        %1757 = vmatpush.bf16.xpose.msra.mxu0 %v1735
        %1758 = vmatpush.bf16.xpose.msra.mxu0 %v1732
        %1759 = vmatpush.bf16.xpose.msra.mxu0 %v1729
        %1760 = vmatmul.bf16.gmra.mxu0 %v1726
        %v1761 = vpop.f32.mrf.mxu0
        %v1762 = vadd.f32 %v974, %v1761
        %v1763 = vpop.f32.mrf.mxu0
        %v1764 = vadd.f32 %v974, %v1763
        %1765 = vdwg.mxu0
        %1766 = vmax.xlane.f32.xlu0 %v1762
        %v1767 = vpop.xlane.xlu0 %1766
        %1768 = vmax.xlane.f32.xlu0 %v1764
        %v1769 = vpop.xlane.xlu0 %1768
        %v1770 = vsub.f32 %v1762, %v1767
        %v1771 = vsub.f32 %v1764, %v1769
        %v1772 = vmul.f32 %v1770, 1.442695
        %v1773 = vpow.pop %v1772
        %v1774 = vmul.f32 %v1771, 1.442695
        %v1775 = vpow.pop %v1774
        %1776 = vadd.xlane.f32.xlu0 %v1773
        %v1777 = vpop.xlane.xlu0 %1776
        %1778 = vadd.xlane.f32.xlu0 %v1775
        %v1779 = vpop.xlane.xlu0 %1778
        %v1780 = vrcp.pop %v1777
        %v1781 = vrcp.pop %v1779
        %v1782 = vmul.f32 %v1773, %v1780
        %v1783 = vmul.f32 %v1775, %v1781
        %v1784 = vpack.c.bf16 %v1782, %v1782
        %v1785 = vpack.c.bf16 %v1783, %v1783
        %s1786 = scalar_lea.vmem %s501, 24 [#allocation6]
        %1787 = vst [vmem:[%s1786] sm:$0xf] %v1784
        %1788 = vst [vmem:[%s1786 + $0x4] sm:$0xf] %v1785
        %v1791 = vunpack.c.l.b16 %v1784
        %v1792 = vunpack.c.l.b16 %v1785
        %v1793 = vpack.c.b16 %v1792, %v1791
        %v1811 = vunpack.c.l.b16 %v1651
        %v1812 = vunpack.c.l.b16 %v1652
        %v1813 = vunpack.c.l.b16 %v1653
        %v1814 = vunpack.c.l.b16 %v1654
        %v1815 = vunpack.c.l.b16 %v1655
        %v1816 = vunpack.c.l.b16 %v1656
        %v1817 = vunpack.c.l.b16 %v1657
        %v1818 = vunpack.c.l.b16 %v1658
        %v1819 = vunpack.c.l.b16 %v1659
        %v1820 = vunpack.c.l.b16 %v1660
        %v1821 = vunpack.c.l.b16 %v1661
        %v1822 = vunpack.c.l.b16 %v1662
        %v1823 = vunpack.c.l.b16 %v1663
        %v1824 = vunpack.c.l.b16 %v1664
        %v1825 = vunpack.c.l.b16 %v1665
        %v1826 = vunpack.c.l.b16 %v1666
        %v1827 = vpack.c.b16 %v1812, %v1811
        %v1828 = vpack.c.b16 %v1814, %v1813
        %v1829 = vpack.c.b16 %v1816, %v1815
        %v1830 = vpack.c.b16 %v1818, %v1817
        %v1831 = vpack.c.b16 %v1820, %v1819
        %v1832 = vpack.c.b16 %v1822, %v1821
        %v1833 = vpack.c.b16 %v1824, %v1823
        %v1834 = vpack.c.b16 %v1826, %v1825
        %1835 = vrot.lane.b32.xlu0 %v1827, 104
        %v1836 = vpop.permute.xlu0 %1835
        %1837 = vrot.lane.b32.xlu0 %v1828, 104
        %v1838 = vpop.permute.xlu0 %1837
        %1839 = vrot.lane.b32.xlu0 %v1829, 104
        %v1840 = vpop.permute.xlu0 %1839
        %1841 = vrot.lane.b32.xlu0 %v1830, 104
        %v1842 = vpop.permute.xlu0 %1841
        %1843 = vrot.lane.b32.xlu0 %v1831, 104
        %v1844 = vpop.permute.xlu0 %1843
        %1845 = vrot.lane.b32.xlu0 %v1832, 104
        %v1846 = vpop.permute.xlu0 %1845
        %1847 = vrot.lane.b32.xlu0 %v1833, 104
        %v1848 = vpop.permute.xlu0 %1847
        %1849 = vrot.lane.b32.xlu0 %v1834, 104
        %v1850 = vpop.permute.xlu0 %1849
        %1859 = vmatpush.bf16.msra.mxu0 %v1850
        %1860 = vmatpush.bf16.msra.mxu0 %v1848
        %1861 = vmatpush.bf16.msra.mxu0 %v1846
        %1862 = vmatpush.bf16.msra.mxu0 %v1844
        %1863 = vmatpush.bf16.msra.mxu0 %v1842
        %1864 = vmatpush.bf16.msra.mxu0 %v1840
        %1865 = vmatpush.bf16.msra.mxu0 %v1838
        %1866 = vmatpush.bf16.msra.mxu0 %v1836
        %1867 = vmatmul.bf16.gmra.mxu0 %v1793
        %v1868 = vpop.f32.mrf.mxu0
        %v1869 = vadd.f32 0.0, %v1868
        %v1870 = vpop.f32.mrf.mxu0
        %v1871 = vadd.f32 0.0, %v1870
        %1872 = vdwg.mxu0
        %v1873 = vpack.c.bf16 %v1869, %v1869
        %v1874 = vpack.c.bf16 %v1871, %v1871
        %v1877 = vunpack.c.l.b16 %v1153
        %v1878 = vunpack.c.l.b16 %v1154
        %v1879 = vpack.c.b16 %v1878, %v1877
        %v1882 = vunpack.c.l.b16 %v1393
        %v1883 = vunpack.c.l.b16 %v1394
        %v1884 = vpack.c.b16 %v1883, %v1882
        %1885 = vrot.lane.b32.xlu0 %v1884, 8
        %v1886 = vpop.permute.xlu0 %1885
        %v1889 = vunpack.c.l.b16 %v1633
        %v1890 = vunpack.c.l.b16 %v1634
        %v1891 = vpack.c.b16 %v1890, %v1889
        %1892 = vrot.lane.b32.xlu0 %v1891, 16
        %v1893 = vpop.permute.xlu0 %1892
        %v1896 = vunpack.c.l.b16 %v1873
        %v1897 = vunpack.c.l.b16 %v1874
        %v1898 = vpack.c.b16 %v1897, %v1896
        %1899 = vrot.lane.b32.xlu0 %v1898, 24
        %v1900 = vpop.permute.xlu0 %1899
        %v1903 = vsel %vm1021, %v1879, %v1886
        %vm1904 = vcmask 130048
        %v1906 = vsel %vm1904, %v1903, %v1893
        %vm1907 = vcmask 195584
        %v1909 = vsel %vm1907, %v1906, %v1900
        %v1910 = vld [vmem:[%s9] sm:$0xf]
        %v1911 = vld [vmem:[%s9 + $0x4] sm:$0xf]
        %v1912 = vld [vmem:[%s9 + $0x8] sm:$0xf]
        %v1913 = vld [vmem:[%s9 + $0xc] sm:$0xf]
        %v1914 = vld [vmem:[%s10] sm:$0x1]
        %v1916 = vperm.slane %v1914, 0
        %v1922 = vunpack.c.l.b16 %v1910
        %v1923 = vunpack.c.l.b16 %v1911
        %v1924 = vunpack.c.l.b16 %v1912
        %v1925 = vunpack.c.l.b16 %v1913
        %v1926 = vpack.c.b16 %v1923, %v1922
        %v1927 = vpack.c.b16 %v1925, %v1924
        %v1930 = vsel %vm920, %v1909, 0
        %1932 = vmatpush.bf16.msra.mxu0 0
        %1933 = vmatpush.bf16.msra.mxu0 0
        %1934 = vmatpush.bf16.msra.mxu0 0
        %1935 = vmatpush.bf16.msra.mxu0 0
        %1936 = vmatpush.bf16.msra.mxu0 0
        %1937 = vmatpush.bf16.msra.mxu0 0
        %1938 = vmatpush.bf16.msra.mxu0 %v1927
        %1939 = vmatpush.bf16.msra.mxu0 %v1926
        %1940 = vmatmul.bf16.gmra.mxu0 %v1930
        %v1941 = vpop.f32.mrf.mxu0
        %v1942 = vadd.f32 %v1916, %v1941
        %v1943 = vpop.f32.mrf.mxu0
        %v1944 = vadd.f32 %v1916, %v1943
        %1945 = vdwg.mxu0
        %1946 = vst.msk [vmem:[%s494] sm:$0xff] %vm920, %v1942
        %1947 = vst.msk [vmem:[%s494 + $0x8] sm:$0xff] %vm920, %v1944
        %s1948 = sand.u32 %s322, 1
        %s1949 = scalar_lea.sflag [#allocation5], %s1948
        %s1950 = sand.u32 %s322, 1
        %s1951 = smul.addr %s1950, 16
        %s1952 = scalar_lea.vmem [#allocation4], %s1951
        %s1953 = sand.u32 %s350, 1
        %s1954 = scalar_lea.sflag [#allocation7], %s1953
        %s1955 = sand.u32 %s350, 1
        %s1956 = smul.addr %s1955, 32
        %s1957 = scalar_lea.vmem [#allocation6], %s1956
        // Predicated region
        $region73: #{tpu_custom_call.1} parent=67 // pred_check
          %p1958 = pneg %p332
        $region74: #{tpu_custom_call.1} parent=67 // pred_check_branch
          %1960 = sbr.rel (%p1958) target = $region76
        $region75: #{tpu_custom_call.1} parent=67 // pred_region
          %s1961 = smul.u32 2, %s36
          %1963 = vsyncadd %s1949, 0
          %s1964 = smul.addr %s35, 2
          %s1965 = sadd.s32 %s1961, %s1964
          %s1966 = smul.addr %s1965, 8
          %s1967 = scalar_lea.hbm %s12, %s1966
          %s1968 = sshll.u32 %s1952, 4
          %s1969 = int_to_ptr.vmem [resolvable:$true] %s1968
          %s1970 = sshll.u32 %s1967, 4
          %s1971 = int_to_ptr.hbm [resolvable:$true] %s1970
          %1976 = dma.vmem_to_hbm [thread:$0]  %s1969, 256, %s1971, %s1949, 128, 128, 8
        $region76: #{tpu_custom_call.1} parent=67 // pred_fallthru
          _
        // Predicated region
        $region77: #{tpu_custom_call.1} parent=67 // pred_check
          %p1977 = pneg %p360
        $region78: #{tpu_custom_call.1} parent=67 // pred_check_branch
          %1979 = sbr.rel (%p1977) target = $region80
        $region79: #{tpu_custom_call.1} parent=67 // pred_region
          %s1980 = smul.u32 2, %s36
          %1982 = vsyncadd %s1954, 0
          %s1983 = smul.addr %s35, 8
          %s1984 = sadd.s32 %s1980, %s1983
          %s1985 = smul.addr %s1984, 4
          %s1986 = scalar_lea.hbm %s13, %s1985
          %s1987 = sshll.u32 %s1957, 4
          %s1988 = int_to_ptr.vmem [resolvable:$true] %s1987
          %s1989 = sshll.u32 %s1986, 4
          %s1990 = int_to_ptr.hbm [resolvable:$true] %s1989
          %1995 = dma.vmem_to_hbm [thread:$0]  %s1988, 512, %s1990, %s1954, 64, 64, 4
        $region80: #{tpu_custom_call.1} parent=67 // pred_fallthru
          _
      $region68: #{tpu_custom_call.1} parent=5 // pred_fallthru
        _
      %p1996 = scmp.le.s32.totalorder 2, %s26
      // Predicated region
      $region81: #{tpu_custom_call.1} parent=5 // pred_check
        %p1997 = pneg %p1996
      $region82: #{tpu_custom_call.1} parent=5 // pred_check_branch
        %1999 = sbr.rel (%p1997) target = $region84
      $region83: #{tpu_custom_call.1} parent=5 // pred_region
        %s2000 = ssub.s32 %s26, 2
        // Predicated region
        $region85: #{tpu_custom_call.1} parent=83 // pred_check
          %p2001 = pneg %p338
        $region86: #{tpu_custom_call.1} parent=83 // pred_check_branch
          %2003 = sbr.rel (%p2001) target = $region88
        $region87: #{tpu_custom_call.1} parent=83 // pred_region
          %s2004 = sand.u32 %s323, 1
          %s2005 = scalar_lea.sflag [#allocation5], %s2004
          %s2006 = sand.u32 %s323, 1
          %s2007 = smul.addr %s2006, 16
          %s2008 = scalar_lea.vmem [#allocation4], %s2007
          %2010 = dma.done %s2005, 256
        $region88: #{tpu_custom_call.1} parent=83 // pred_fallthru
          _
        // Predicated region
        $region89: #{tpu_custom_call.1} parent=83 // pred_check
          %p2011 = pneg %p366
        $region90: #{tpu_custom_call.1} parent=83 // pred_check_branch
          %2013 = sbr.rel (%p2011) target = $region92
        $region91: #{tpu_custom_call.1} parent=83 // pred_region
          %s2014 = sand.u32 %s351, 1
          %s2015 = scalar_lea.sflag [#allocation7], %s2014
          %s2016 = sand.u32 %s351, 1
          %s2017 = smul.addr %s2016, 32
          %s2018 = scalar_lea.vmem [#allocation6], %s2017
          %2020 = dma.done %s2015, 512
        $region92: #{tpu_custom_call.1} parent=83 // pred_fallthru
          _
      $region84: #{tpu_custom_call.1} parent=5 // pred_fallthru
        _
    $region6: #{tpu_custom_call.1} parent=1 // loop_footer
      %s30 = sadd.s32 1, %s26
    $region7: #{tpu_custom_call.1} parent=1 // loop_footer_branch
      %25 = sbr.rel target = $region3
    $region8: #{tpu_custom_call.1} parent=1 // loop_exit
      _
    %2021 = vsyncpa [#allocation5], 1
    %s2022 = scalar_lea.sflag [#allocation5], 1
    %2023 = vsyncpa %s2022, 1
    %2024 = vsyncpa [#allocation7], 1
    %s2025 = scalar_lea.sflag [#allocation7], 1
    %2026 = vsyncpa %s2025, 1

</llo_original>
